<compile_context>
chip_gen: v6e
topology: v6e:2x2x1
jax: 0.10.0
libtpu: 0.0.40
codegen_flags: <defaults>
</compile_context>

<pallas_src>
import functools

import jax
import jax.numpy as jnp
from jax.experimental import pallas as pl
from jax.experimental.pallas import tpu as pltpu


# ----------------------------- kernel body ---------------------------------


def _rl_mlp_kernel(x_ref, w1_ref, b1_ref, w2_ref, b2_ref, m_ref, e_ref, o_ref):
    # x : (TR, P*D_in)            w1: (P*D_in, P*H)       b1: (1, P*H)      [f32]
    # w2: (P*H, P*D_out_pad)      b2: (1, P*D_out_pad)    [f32]
    # m : (TR, P)                 e : (P, P*D_out_pad)    o : (TR, P*D_out_pad)
    w1 = w1_ref[...]
    w2 = w2_ref[...]
    # Single in-kernel cast (the torch module's `.float()`); with bf16 weights
    # the MXU runs native bf16 x bf16 -> f32.
    x = x_ref[...].astype(w1.dtype)
    h = jnp.dot(x, w1, preferred_element_type=jnp.float32)
    h = jnp.maximum(h + b1_ref[...], 0.0)                 # bias + ReLU in f32 (VPU)
    y = jnp.dot(h.astype(w2.dtype), w2, preferred_element_type=jnp.float32)
    y = y + b2_ref[...]
    # Per-row mask -> per-lane mask via a tiny 0/1 expansion matmul, keeping the
    # final store lane-dense without any in-kernel reshape/relayout.
    m = jnp.dot(m_ref[...].astype(jnp.float32), e_ref[...],
                preferred_element_type=jnp.float32)
    o_ref[...] = (y * m).astype(o_ref.dtype)


# ------------------------- one-time weight packing --------------------------

_DIVISORS_OF_128 = (1, 2, 4, 8, 16, 32, 64, 128)


def pack_rl_network_params(w1, b1, w2, b2, param_dtype=jnp.bfloat16,
                           max_packed_weight_bytes=8 * 1024 * 1024):
    """One-time weight re-layout (call at model-load time, NOT per forward).

    w1: [D_in, H], b1: [H], w2: [H, D_out], b2: [D_out].
    Expands the weights into block-diagonal form so PACK batch rows share one
    lane-dense "wide row".  If D_out does not divide 128 it is padded up to the
    next divisor of 128 (zero columns, sliced off in the wrapper) so the output
    store stays lane-dense for arbitrary heads.  bf16 weights are the default
    (MXU-native, half the resident-weight DMA); pass jnp.float32 for the
    bit-exact torch `.float()` contract.
    """
    d_in, h = w1.shape
    h2, d_out = w2.shape
    assert h2 == h and b1.shape == (h,) and b2.shape == (d_out,)

    # Lane-dense output width: pad d_out up to a divisor (or multiple) of 128.
    if d_out >= 128:
        d_out_pad = ((d_out + 127) // 128) * 128
    else:
        d_out_pad = next(d for d in _DIVISORS_OF_128 if d >= d_out)
    pack = max(1, 128 // d_out_pad)

    # Respect the packed-weight byte budget (w1p grows as pack^2): halve pack
    # until it fits; output lane width degrades gracefully (pack*d_out_pad).
    itemsize = jnp.dtype(param_dtype).itemsize

    def _packed_bytes(p):
        return itemsize * (p * d_in * p * h + p * h * p * d_out_pad)

    while pack > 1 and _packed_bytes(pack) > max_packed_weight_bytes:
        pack //= 2

    f32 = jnp.float32
    w1f, b1f = w1.astype(f32), b1.astype(f32)
    w2f, b2f = w2.astype(f32), b2.astype(f32)
    if d_out_pad != d_out:
        w2f = jnp.pad(w2f, ((0, 0), (0, d_out_pad - d_out)))
        b2f = jnp.pad(b2f, ((0, d_out_pad - d_out),))

    eye = jnp.eye(pack, dtype=f32)
    w1p = jnp.kron(eye, w1f).astype(param_dtype)                  # (P*D_in, P*H)
    w2p = jnp.kron(eye, w2f).astype(param_dtype)                  # (P*H, P*D_out_pad)
    b1p = jnp.tile(b1f.reshape(1, h), (1, pack))                  # (1, P*H)          f32
    b2p = jnp.tile(b2f.reshape(1, d_out_pad), (1, pack))          # (1, P*D_out_pad)  f32
    expand = jnp.kron(eye, jnp.ones((1, d_out_pad), f32))         # (P, P*D_out_pad)  f32
    return dict(pack=pack, d_in=d_in, h=h, d_out=d_out, d_out_pad=d_out_pad,
                w1=w1p, b1=b1p, w2=w2p, b2=b2p, expand=expand)


# ------------------------- per-generation tile sizing -----------------------


@functools.lru_cache(maxsize=1)
def _tpu_generation():
    try:
        kind = jax.devices()[0].device_kind.lower()
    except Exception:  # pragma: no cover - defensive
        return "unknown"
    if "v5" in kind:
        return "v5e"
    if "v6" in kind:
        return "v6e"
    if "v7" in kind or "7x" in kind:
        return "v7x"
    return "unknown"


def _vmem_plan(gen):
    """-> (vmem_limit_bytes, tile_budget_bytes, row_tile_cap, min_grid_steps)."""
    if gen in ("v5e", "v6e"):
        # 128 MiB physical VMEM: raise the scoped limit and use big tiles to
        # amortize the ~0.35us per-grid-step overhead.
        return 64 * 1024 * 1024, 44 * 1024 * 1024, 1024, 2
    # v7x (64 MiB physical / 32 MiB scoped default) and unknown: conservative.
    return 32 * 1024 * 1024, 22 * 1024 * 1024, 512, 2


def _pick_row_tile(num_rows, per_row_bytes, resident_bytes, budget_bytes,
                   tr_cap, min_steps):
    avail = max(budget_bytes - resident_bytes, 2 * 1024 * 1024)
    tr = min(tr_cap, avail // max(per_row_bytes, 1))
    tr = max(8, (tr // 8) * 8)
    if min_steps >= 2 and num_rows >= 16:
        # round-up-to-8(ceil(R/min_steps)) is < R for R >= 16, guaranteeing at
        # least `min_steps` grid steps (DMA/compute overlap + 2-TC split on v7x).
        step_cap = ((pl.cdiv(num_rows, min_steps) + 7) // 8) * 8
        tr = min(tr, max(8, step_cap))
    return num_rows if tr >= num_rows else tr


# ------------------------------ forward wrapper ------------------------------


def rl_network_forward(features, mask, params, out_dtype=jnp.float32):
    """features: [B, D_in] (any dtype), mask: [B] (any dtype) -> [B, D_out]."""
    pack, d_in, h = params["pack"], params["d_in"], params["h"]
    d_out, d_out_pad = params["d_out"], params["d_out_pad"]
    B = features.shape[0]
    assert features.shape == (B, d_in)
    mask = jnp.reshape(mask, (-1,))
    assert mask.shape[0] == B

    # Pad the batch to a multiple of PACK (no-op when already aligned).
    Bp = ((B + pack - 1) // pack) * pack
    if Bp != B:
        features = jnp.pad(features, ((0, Bp - B), (0, 0)))
        mask = jnp.pad(mask, ((0, Bp - B),))
    R = Bp // pack

    # Free, contiguous re-views: no data movement, no wrapper-side dtype cast
    # (bf16 features stream at half the bytes; the cast happens in-kernel).
    x_wide = features.reshape(R, pack * d_in)
    m_blk = mask.reshape(R, pack)

    vmem_limit, budget, tr_cap, min_steps = _vmem_plan(_tpu_generation())

    def _nbytes(a):
        return a.size * a.dtype.itemsize

    resident = 2 * sum(_nbytes(params[k]) for k in ("w1", "b1", "w2", "b2", "expand"))
    out_itemsize = jnp.dtype(out_dtype).itemsize
    per_row = (2 * pack * d_in * features.dtype.itemsize     # streamed x  (double-buffered)
               + 2 * pack * mask.dtype.itemsize              # streamed mask
               + 2 * pack * d_out_pad * out_itemsize         # streamed out
               + pack * d_in * params["w1"].dtype.itemsize   # in-kernel x cast
               + pack * h * 4                                # f32 hidden
               + pack * d_out_pad * 4)                       # f32 pre-mask result
    TR = _pick_row_tile(R, per_row, resident, budget, tr_cap, min_steps)
    grid = (pl.cdiv(R, TR),)

    flops = 2 * R * (pack * d_in * pack * h
                     + pack * h * pack * d_out_pad
                     + pack * pack * d_out_pad)
    bytes_accessed = (_nbytes(x_wide) + _nbytes(m_blk)
                      + sum(_nbytes(params[k]) for k in ("w1", "b1", "w2", "b2", "expand"))
                      + R * pack * d_out_pad * out_itemsize)

    def const_spec(shape):
        # Constant block index -> fetched once per call, resident across grid.
        return pl.BlockSpec(shape, lambda i: (0, 0))

    out_wide = pl.pallas_call(
        _rl_mlp_kernel,
        out_shape=jax.ShapeDtypeStruct((R, pack * d_out_pad), out_dtype),
        grid=grid,
        in_specs=[
            pl.BlockSpec((TR, pack * d_in), lambda i: (i, 0)),    # features (streamed)
            const_spec((pack * d_in, pack * h)),                  # w1  (resident)
            const_spec((1, pack * h)),                            # b1
            const_spec((pack * h, pack * d_out_pad)),             # w2
            const_spec((1, pack * d_out_pad)),                    # b2
            pl.BlockSpec((TR, pack), lambda i: (i, 0)),           # mask (streamed)
            const_spec((pack, pack * d_out_pad)),                 # mask expansion
        ],
        out_specs=pl.BlockSpec((TR, pack * d_out_pad), lambda i: (i, 0)),
        compiler_params=pltpu.CompilerParams(
            dimension_semantics=("parallel",),                    # 2-TC split on v7x
            vmem_limit_bytes=vmem_limit),
        cost_estimate=pl.CostEstimate(flops=flops, transcendentals=0,
                                      bytes_accessed=bytes_accessed),
    )(x_wide, params["w1"], params["b1"], params["w2"], params["b2"],
      m_blk, params["expand"])

    out = out_wide.reshape(Bp, d_out_pad)                         # free reshape
    if Bp != B or d_out_pad != d_out:
        out = out[:B, :d_out]
    return out


# --------------------------------- demo -------------------------------------


def _torch_linear_init(key, fan_in, fan_out):
    # PyTorch nn.Linear default: U(-1/sqrt(fan_in), 1/sqrt(fan_in)) for W and b.
    kw, kb = jax.random.split(key)
    bound = 1.0 / jnp.sqrt(jnp.float32(fan_in))
    w = jax.random.uniform(kw, (fan_in, fan_out), jnp.float32, -bound, bound)
    b = jax.random.uniform(kb, (fan_out,), jnp.float32, -bound, bound)
    return w, b


def _mlp_ref(x, m, w1, b1, w2, b2):
    return (jnp.maximum(x @ w1 + b1, 0.0) @ w2 + b2) * m[:, None].astype(jnp.float32)


def _rb(a):  # round-trip through bf16, matching the in-kernel casts
    return a.astype(jnp.bfloat16).astype(jnp.float32)


if __name__ == "__main__":
    key = jax.random.PRNGKey(0)
    k_feat, k_mask, k_l1, k_l2 = jax.random.split(key, 4)

    B, D_in, H, D_out = 64, 32, 64, 8
    w1, b1 = _torch_linear_init(k_l1, D_in, H)
    w2, b2 = _torch_linear_init(k_l2, H, D_out)
    features = jax.random.normal(k_feat, (B, D_in), jnp.float32)
    mask = (jax.random.uniform(k_mask, (B,)) > 0.25).astype(jnp.int32)   # done-mask

    # 1) Default path: bf16 packed weights, f32 accumulate + f32 elementwise.
    params = pack_rl_network_params(w1, b1, w2, b2)
    out = jax.block_until_ready(rl_network_forward(features, mask, params))
    h_ref = jnp.maximum(_rb(features) @ _rb(w1) + b1, 0.0)
    ref_bf16 = (_rb(h_ref) @ _rb(w2) + b2) * mask[:, None].astype(jnp.float32)
    assert out.shape == (B, D_out)
    assert jnp.allclose(out, ref_bf16, atol=2e-2, rtol=2e-2), \
        float(jnp.max(jnp.abs(out - ref_bf16)))

    # 2) f32 weights: matches the torch `.float()` contract bit-for-bit-ish.
    params_f32 = pack_rl_network_params(w1, b1, w2, b2, param_dtype=jnp.float32)
    out_f32 = jax.block_until_ready(rl_network_forward(features, mask, params_f32))
    ref = _mlp_ref(features, mask, w1, b1, w2, b2)
    assert jnp.allclose(out_f32, ref, atol=1e-5, rtol=1e-5), \
        float(jnp.max(jnp.abs(out_f32 - ref)))

    # 3) Multi-step grid (>=2 steps when R>=16) with bf16 features streaming.
    B2 = 256
    kf2, km2 = jax.random.split(jax.random.PRNGKey(1))
    feat2 = jax.random.normal(kf2, (B2, D_in), jnp.float32).astype(jnp.bfloat16)
    mask2 = (jax.random.uniform(km2, (B2,)) > 0.25).astype(jnp.float32)
    out2 = jax.block_until_ready(rl_network_forward(feat2, mask2, params))
    h2 = jnp.maximum(feat2.astype(jnp.float32) @ _rb(w1) + b1, 0.0)
    ref2 = (_rb(h2) @ _rb(w2) + b2) * mask2[:, None]
    assert out2.shape == (B2, D_out)
    assert jnp.allclose(out2, ref2, atol=2e-2, rtol=2e-2), \
        float(jnp.max(jnp.abs(out2 - ref2)))

    # 4) Non-divisor head (D_out=5): padded to 8 internally, still lane-dense.
    D_out5 = 5
    w2b, b2b = _torch_linear_init(jax.random.PRNGKey(2), H, D_out5)
    params5 = pack_rl_network_params(w1, b1, w2b, b2b, param_dtype=jnp.float32)
    B3 = 40
    feat3 = jax.random.normal(jax.random.PRNGKey(3), (B3, D_in), jnp.float32)
    mask3 = jnp.ones((B3,), jnp.float32)
    out5 = jax.block_until_ready(rl_network_forward(feat3, mask3, params5))
    ref5 = _mlp_ref(feat3, mask3, w1, b1, w2b, b2b)
    assert out5.shape == (B3, D_out5)
    assert jnp.allclose(out5, ref5, atol=1e-5, rtol=1e-5), \
        float(jnp.max(jnp.abs(out5 - ref5)))

    print("KERNEL_OK")
</pallas_src>

<mosaic_0001>
module attributes {stable_mosaic.version = 11 : i64} {
  func.func @_rl_mlp_kernel(%arg0: i32, %arg1: memref<4x512xf32, #tpu.memory_space<vmem>>, %arg2: memref<512x1024xbf16, #tpu.memory_space<vmem>>, %arg3: memref<1x1024xf32, #tpu.memory_space<vmem>>, %arg4: memref<1024x128xbf16, #tpu.memory_space<vmem>>, %arg5: memref<1x128xf32, #tpu.memory_space<vmem>>, %arg6: memref<4x16xi32, #tpu.memory_space<vmem>>, %arg7: memref<16x128xf32, #tpu.memory_space<vmem>>, %arg8: memref<4x128xf32, #tpu.memory_space<vmem>>) attributes {dimension_semantics = [#tpu.dimension_semantics<parallel>], iteration_bounds = array<i64: 1>, scalar_prefetch = 0 : i64, scratch_operands = 0 : i64, tpu.core_type = #tpu.core_type<tc>, window_params = [{transform_indices = @transform_0, window_bounds = array<i64: 4, 512>}, {pipeline_mode = #tpu.pipeline_mode<synchronous>, transform_indices = @transform_1, window_bounds = array<i64: 512, 1024>}, {pipeline_mode = #tpu.pipeline_mode<synchronous>, transform_indices = @transform_2, window_bounds = array<i64: 1, 1024>}, {pipeline_mode = #tpu.pipeline_mode<synchronous>, transform_indices = @transform_3, window_bounds = array<i64: 1024, 128>}, {pipeline_mode = #tpu.pipeline_mode<synchronous>, transform_indices = @transform_4, window_bounds = array<i64: 1, 128>}, {transform_indices = @transform_5, window_bounds = array<i64: 4, 16>}, {pipeline_mode = #tpu.pipeline_mode<synchronous>, transform_indices = @transform_6, window_bounds = array<i64: 16, 128>}, {transform_indices = @transform_7, window_bounds = array<i64: 4, 128>}]} {
    %c0 = arith.constant 0 : index
    %c0_0 = arith.constant 0 : index
    %0 = vector.load %arg2[%c0, %c0_0] : memref<512x1024xbf16, #tpu.memory_space<vmem>>, vector<512x1024xbf16>
    %c0_1 = arith.constant 0 : index
    %c0_2 = arith.constant 0 : index
    %1 = vector.load %arg4[%c0_1, %c0_2] : memref<1024x128xbf16, #tpu.memory_space<vmem>>, vector<1024x128xbf16>
    %c0_3 = arith.constant 0 : index
    %c0_4 = arith.constant 0 : index
    %2 = vector.load %arg1[%c0_3, %c0_4] : memref<4x512xf32, #tpu.memory_space<vmem>>, vector<4x512xf32>
    %3 = arith.truncf %2 : vector<4x512xf32> to vector<4x512xbf16>
    %cst = arith.constant dense<0.000000e+00> : vector<4x1024xf32>
    %4 = tpu.matmul %3, %0, %cst {dimension_numbers = #tpu.dot_dimension_numbers<[1], [0], [0], [1], [0, 0, 1, 1], [], []>} : vector<4x512xbf16>, vector<512x1024xbf16>, vector<4x1024xf32> -> vector<4x1024xf32>
    %c0_5 = arith.constant 0 : index
    %c0_6 = arith.constant 0 : index
    %5 = vector.load %arg3[%c0_5, %c0_6] : memref<1x1024xf32, #tpu.memory_space<vmem>>, vector<1x1024xf32>
    %6 = vector.broadcast %5 : vector<1x1024xf32> to vector<4x1024xf32>
    %7 = arith.addf %4, %6 : vector<4x1024xf32>
    %cst_7 = arith.constant 0.000000e+00 : f32
    %8 = vector.broadcast %cst_7 : f32 to vector<4x1024xf32>
    %9 = arith.maximumf %7, %8 : vector<4x1024xf32>
    %10 = arith.truncf %9 : vector<4x1024xf32> to vector<4x1024xbf16>
    %cst_8 = arith.constant dense<0.000000e+00> : vector<4x128xf32>
    %11 = tpu.matmul %10, %1, %cst_8 {dimension_numbers = #tpu.dot_dimension_numbers<[1], [0], [0], [1], [0, 0, 1, 1], [], []>} : vector<4x1024xbf16>, vector<1024x128xbf16>, vector<4x128xf32> -> vector<4x128xf32>
    %c0_9 = arith.constant 0 : index
    %c0_10 = arith.constant 0 : index
    %12 = vector.load %arg5[%c0_9, %c0_10] : memref<1x128xf32, #tpu.memory_space<vmem>>, vector<1x128xf32>
    %13 = vector.broadcast %12 : vector<1x128xf32> to vector<4x128xf32>
    %14 = arith.addf %11, %13 : vector<4x128xf32>
    %c0_11 = arith.constant 0 : index
    %c0_12 = arith.constant 0 : index
    %15 = vector.load %arg6[%c0_11, %c0_12] : memref<4x16xi32, #tpu.memory_space<vmem>>, vector<4x16xi32>
    %16 = arith.sitofp %15 : vector<4x16xi32> to vector<4x16xf32>
    %c0_13 = arith.constant 0 : index
    %c0_14 = arith.constant 0 : index
    %17 = vector.load %arg7[%c0_13, %c0_14] : memref<16x128xf32, #tpu.memory_space<vmem>>, vector<16x128xf32>
    %cst_15 = arith.constant dense<0.000000e+00> : vector<4x128xf32>
    %18 = tpu.matmul %16, %17, %cst_15 {dimension_numbers = #tpu.dot_dimension_numbers<[1], [0], [0], [1], [0, 0, 1, 1], [], []>} : vector<4x16xf32>, vector<16x128xf32>, vector<4x128xf32> -> vector<4x128xf32>
    %19 = arith.mulf %14, %18 : vector<4x128xf32>
    %c0_16 = arith.constant 0 : index
    %c0_17 = arith.constant 0 : index
    %20 = vector.load %arg8[%c0_16, %c0_17] : memref<4x128xf32, #tpu.memory_space<vmem>>, vector<4x128xf32>
    tpu.vector_store %arg8[%c0_16, %c0_17], %19 {strides = array<i32>} : memref<4x128xf32, #tpu.memory_space<vmem>>, vector<4x128xf32>,
    return
  }
  func.func @transform_0(%arg0: i32) -> (i32, i32) {
    %c0_i32 = arith.constant 0 : i32
    %c0_i32_0 = arith.constant 0 : i32
    return %arg0, %c0_i32 : i32, i32
  }
  func.func @transform_1(%arg0: i32) -> (i32, i32) {
    %c0_i32 = arith.constant 0 : i32
    %c0_i32_0 = arith.constant 0 : i32
    %c0_i32_1 = arith.constant 0 : i32
    return %c0_i32, %c0_i32_0 : i32, i32
  }
  func.func @transform_2(%arg0: i32) -> (i32, i32) {
    %c0_i32 = arith.constant 0 : i32
    %c0_i32_0 = arith.constant 0 : i32
    %c0_i32_1 = arith.constant 0 : i32
    return %c0_i32, %c0_i32_0 : i32, i32
  }
  func.func @transform_3(%arg0: i32) -> (i32, i32) {
    %c0_i32 = arith.constant 0 : i32
    %c0_i32_0 = arith.constant 0 : i32
    %c0_i32_1 = arith.constant 0 : i32
    return %c0_i32, %c0_i32_0 : i32, i32
  }
  func.func @transform_4(%arg0: i32) -> (i32, i32) {
    %c0_i32 = arith.constant 0 : i32
    %c0_i32_0 = arith.constant 0 : i32
    %c0_i32_1 = arith.constant 0 : i32
    return %c0_i32, %c0_i32_0 : i32, i32
  }
  func.func @transform_5(%arg0: i32) -> (i32, i32) {
    %c0_i32 = arith.constant 0 : i32
    %c0_i32_0 = arith.constant 0 : i32
    return %arg0, %c0_i32 : i32, i32
  }
  func.func @transform_6(%arg0: i32) -> (i32, i32) {
    %c0_i32 = arith.constant 0 : i32
    %c0_i32_0 = arith.constant 0 : i32
    %c0_i32_1 = arith.constant 0 : i32
    return %c0_i32, %c0_i32_0 : i32, i32
  }
  func.func @transform_7(%arg0: i32) -> (i32, i32) {
    %c0_i32 = arith.constant 0 : i32
    %c0_i32_0 = arith.constant 0 : i32
    return %arg0, %c0_i32 : i32, i32
  }
}

</mosaic_0001>

<llo_original>
// kernel: tpu_custom_call.1
$region0: #{tpu_custom_call.1}
  #allocation0 [shape = 'u32[]', space=smem, size = 0x4, offset = 0x4, fixed_abs, tag = 'smem constant byte address 0x4 - core index']
  #allocation1 [shape = 'u32[144,128]{1,0:T(1,128)}', space=vmem, size = 0x12000, scoped, tag = 'internal scratch']
  %s0 = inlined_call_operand.hbm [shape: f32[4,512], index: 0, kind: input, shape index: {}]
  %s1 = inlined_call_operand.hbm [shape: bf16[512,1024], index: 1, kind: input, shape index: {}]
  %s2 = inlined_call_operand.hbm [shape: f32[1,1024], index: 2, kind: input, shape index: {}]
  %s3 = inlined_call_operand.hbm [shape: bf16[1024,128], index: 3, kind: input, shape index: {}]
  %s4 = inlined_call_operand.vmem [shape: f32[1,128], index: 4, kind: input, shape index: {}]
  %s5 = inlined_call_operand.vmem [shape: s32[4,16], index: 5, kind: input, shape index: {}]
  %s6 = inlined_call_operand.hbm [shape: f32[16,128], index: 6, kind: input, shape index: {}]
  %s7 = inlined_call_operand.hbm [shape: f32[4,128], index: 7, kind: output, shape index: {}]
  %s8 = sld [smem:[#allocation0]]
  $region58: #{tpu_custom_call.1} parent=0
    _
  %s10 = ssub.s32 1, %s8
  %s11 = scalar_select 0, %s10, %s8
  $region1: #{tpu_custom_call.1} parent=0
    #allocation2 [shape = 'u8[8192]{0}', space=vmem, size = 0x2000, scoped, tag = 'input window, operand 0, single buffered']
    #allocation3 [shape = 's32[1]{0}', space=sflag, size = 0x4, scoped, tag = 'scoped memory for tpu_custom_call.1']
    #allocation4 [shape = 's32[1]{0}', space=sflag, size = 0x4, scoped, tag = 'scoped memory for tpu_custom_call.1']
    #allocation5 [shape = 'u8[1048576]{0}', space=vmem, size = 0x100000, scoped, tag = 'input window, operand 1, single buffered']
    #allocation6 [shape = 's32[1]{0}', space=sflag, size = 0x4, scoped, tag = 'scoped memory for tpu_custom_call.1']
    #allocation7 [shape = 'u8[4096]{0}', space=vmem, size = 0x1000, scoped, tag = 'input window, operand 2, single buffered']
    #allocation8 [shape = 'u8[262144]{0}', space=vmem, size = 0x40000, scoped, tag = 'input window, operand 3, single buffered']
    #allocation9 [shape = 's32[1]{0}', space=sflag, size = 0x4, scoped, tag = 'scoped memory for tpu_custom_call.1']
    #allocation10 [shape = 'u8[8192]{0}', space=vmem, size = 0x2000, scoped, tag = 'input window, operand 6, single buffered']
    #allocation11 [shape = 'u8[2048]{0}', space=vmem, size = 0x800, scoped, tag = 'output window, operand 0, single buffered']
    %12 = vsyncpa [#allocation3], 0
    %13 = vsyncpa [#allocation6], 0
    %14 = vsyncpa [#allocation9], 0
    %15 = vsyncpa [#allocation4], 0
    // Predicated region
    $region2: #{tpu_custom_call.1} parent=1 // pred_check
      _
    $region3: #{tpu_custom_call.1} parent=1 // pred_check_branch
      %17 = sbr.rel (0) target = $region5
    $region4: #{tpu_custom_call.1} parent=1 // pred_region
      %s19 = ssub.s32 256, 256
      %20 = vsyncadd [#allocation3], %s19
      %s22 = sshll.u32 [#allocation2], 4
      %s23 = int_to_ptr.vmem [resolvable:$true] %s22
      %25 = dma.hbm_to_vmem [thread:$0]  %s0, 256, %s23, [#allocation3]
    $region5: #{tpu_custom_call.1} parent=1 // pred_fallthru
      _
    // Predicated region
    $region6: #{tpu_custom_call.1} parent=1 // pred_check
      _
    $region7: #{tpu_custom_call.1} parent=1 // pred_check_branch
      %27 = sbr.rel (0) target = $region9
    $region8: #{tpu_custom_call.1} parent=1 // pred_region
      %s29 = ssub.s32 32768, 32768
      %30 = vsyncadd [#allocation6], %s29
      %s31 = sshll.u32 [#allocation5], 4
      %s32 = int_to_ptr.vmem [resolvable:$true] %s31
      %37 = dma.hbm_to_vmem [thread:$0]  %s1, 32768, %s32, [#allocation6], 512, 512, 32
    $region9: #{tpu_custom_call.1} parent=1 // pred_fallthru
      _
    // Predicated region
    $region10: #{tpu_custom_call.1} parent=1 // pred_check
      _
    $region11: #{tpu_custom_call.1} parent=1 // pred_check_branch
      %39 = sbr.rel (0) target = $region13
    $region12: #{tpu_custom_call.1} parent=1 // pred_region
      %s41 = ssub.s32 128, 128
      %42 = vsyncadd [#allocation6], %s41
      %s44 = sshll.u32 [#allocation7], 4
      %s45 = int_to_ptr.vmem [resolvable:$true] %s44
      %47 = dma.hbm_to_vmem [thread:$0]  %s2, 128, %s45, [#allocation6]
    $region13: #{tpu_custom_call.1} parent=1 // pred_fallthru
      _
    // Predicated region
    $region14: #{tpu_custom_call.1} parent=1 // pred_check
      _
    $region15: #{tpu_custom_call.1} parent=1 // pred_check_branch
      %49 = sbr.rel (0) target = $region17
    $region16: #{tpu_custom_call.1} parent=1 // pred_region
      %s51 = ssub.s32 8192, 8192
      %52 = vsyncadd [#allocation9], %s51
      %s53 = sshll.u32 [#allocation8], 4
      %s54 = int_to_ptr.vmem [resolvable:$true] %s53
      %59 = dma.hbm_to_vmem [thread:$0]  %s3, 8192, %s54, [#allocation9], 64, 64, 4
    $region17: #{tpu_custom_call.1} parent=1 // pred_fallthru
      _
    // Predicated region
    $region18: #{tpu_custom_call.1} parent=1 // pred_check
      _
    $region19: #{tpu_custom_call.1} parent=1 // pred_check_branch
      %61 = sbr.rel (0) target = $region21
    $region20: #{tpu_custom_call.1} parent=1 // pred_region
      _
    $region21: #{tpu_custom_call.1} parent=1 // pred_fallthru
      _
    // Predicated region
    $region22: #{tpu_custom_call.1} parent=1 // pred_check
      _
    $region23: #{tpu_custom_call.1} parent=1 // pred_check_branch
      %63 = sbr.rel (0) target = $region25
    $region24: #{tpu_custom_call.1} parent=1 // pred_region
      _
    $region25: #{tpu_custom_call.1} parent=1 // pred_fallthru
      _
    // Predicated region
    $region26: #{tpu_custom_call.1} parent=1 // pred_check
      _
    $region27: #{tpu_custom_call.1} parent=1 // pred_check_branch
      %65 = sbr.rel (0) target = $region29
    $region28: #{tpu_custom_call.1} parent=1 // pred_region
      %s67 = ssub.s32 256, 256
      %68 = vsyncadd [#allocation9], %s67
      %s69 = sshll.u32 [#allocation10], 4
      %s70 = int_to_ptr.vmem [resolvable:$true] %s69
      %75 = dma.hbm_to_vmem [thread:$0]  %s6, 256, %s70, [#allocation9], 128, 128, 8
    $region29: #{tpu_custom_call.1} parent=1 // pred_fallthru
      _
    // Predicated region
    $region30: #{tpu_custom_call.1} parent=1 // pred_check
      _
    $region31: #{tpu_custom_call.1} parent=1 // pred_check_branch
      %77 = sbr.rel (0) target = $region33
    $region32: #{tpu_custom_call.1} parent=1 // pred_region
      %78 = dma.done [#allocation3], 256
    $region33: #{tpu_custom_call.1} parent=1 // pred_fallthru
      _
    // Predicated region
    $region34: #{tpu_custom_call.1} parent=1 // pred_check
      _
    $region35: #{tpu_custom_call.1} parent=1 // pred_check_branch
      %80 = sbr.rel (0) target = $region37
    $region36: #{tpu_custom_call.1} parent=1 // pred_region
      %81 = dma.done [#allocation6], 32768
    $region37: #{tpu_custom_call.1} parent=1 // pred_fallthru
      _
    // Predicated region
    $region38: #{tpu_custom_call.1} parent=1 // pred_check
      _
    $region39: #{tpu_custom_call.1} parent=1 // pred_check_branch
      %83 = sbr.rel (0) target = $region41
    $region40: #{tpu_custom_call.1} parent=1 // pred_region
      %84 = dma.done [#allocation6], 128
    $region41: #{tpu_custom_call.1} parent=1 // pred_fallthru
      _
    // Predicated region
    $region42: #{tpu_custom_call.1} parent=1 // pred_check
      _
    $region43: #{tpu_custom_call.1} parent=1 // pred_check_branch
      %86 = sbr.rel (0) target = $region45
    $region44: #{tpu_custom_call.1} parent=1 // pred_region
      %87 = dma.done [#allocation9], 8192
    $region45: #{tpu_custom_call.1} parent=1 // pred_fallthru
      _
    // Predicated region
    $region46: #{tpu_custom_call.1} parent=1 // pred_check
      _
    $region47: #{tpu_custom_call.1} parent=1 // pred_check_branch
      %89 = sbr.rel (0) target = $region49
    $region48: #{tpu_custom_call.1} parent=1 // pred_region
      %90 = dma.done [#allocation9], 256
    $region49: #{tpu_custom_call.1} parent=1 // pred_fallthru
      _
    %v92 = vld [vmem:[#allocation5] sm:$0xff]
    %v93 = vld [vmem:[#allocation5 + $0x8] sm:$0xff]
    %v94 = vld [vmem:[#allocation5 + $0x10] sm:$0xff]
    %v95 = vld [vmem:[#allocation5 + $0x18] sm:$0xff]
    %v96 = vld [vmem:[#allocation5 + $0x20] sm:$0xff]
    %v97 = vld [vmem:[#allocation5 + $0x28] sm:$0xff]
    %v98 = vld [vmem:[#allocation5 + $0x30] sm:$0xff]
    %v99 = vld [vmem:[#allocation5 + $0x38] sm:$0xff]
    %v100 = vld [vmem:[#allocation5 + $0x40] sm:$0xff]
    %v101 = vld [vmem:[#allocation5 + $0x48] sm:$0xff]
    %v102 = vld [vmem:[#allocation5 + $0x50] sm:$0xff]
    %v103 = vld [vmem:[#allocation5 + $0x58] sm:$0xff]
    %v104 = vld [vmem:[#allocation5 + $0x60] sm:$0xff]
    %v105 = vld [vmem:[#allocation5 + $0x68] sm:$0xff]
    %v106 = vld [vmem:[#allocation5 + $0x70] sm:$0xff]
    %v107 = vld [vmem:[#allocation5 + $0x78] sm:$0xff]
    %v108 = vld [vmem:[#allocation5 + $0x80] sm:$0xff]
    %v109 = vld [vmem:[#allocation5 + $0x88] sm:$0xff]
    %v110 = vld [vmem:[#allocation5 + $0x90] sm:$0xff]
    %v111 = vld [vmem:[#allocation5 + $0x98] sm:$0xff]
    %v112 = vld [vmem:[#allocation5 + $0xa0] sm:$0xff]
    %v113 = vld [vmem:[#allocation5 + $0xa8] sm:$0xff]
    %v114 = vld [vmem:[#allocation5 + $0xb0] sm:$0xff]
    %v115 = vld [vmem:[#allocation5 + $0xb8] sm:$0xff]
    %v116 = vld [vmem:[#allocation5 + $0xc0] sm:$0xff]
    %v117 = vld [vmem:[#allocation5 + $0xc8] sm:$0xff]
    %v118 = vld [vmem:[#allocation5 + $0xd0] sm:$0xff]
    %v119 = vld [vmem:[#allocation5 + $0xd8] sm:$0xff]
    %v120 = vld [vmem:[#allocation5 + $0xe0] sm:$0xff]
    %v121 = vld [vmem:[#allocation5 + $0xe8] sm:$0xff]
    %v122 = vld [vmem:[#allocation5 + $0xf0] sm:$0xff]
    %v123 = vld [vmem:[#allocation5 + $0xf8] sm:$0xff]
    %v124 = vld [vmem:[#allocation5 + $0x100] sm:$0xff]
    %v125 = vld [vmem:[#allocation5 + $0x108] sm:$0xff]
    %v126 = vld [vmem:[#allocation5 + $0x110] sm:$0xff]
    %v127 = vld [vmem:[#allocation5 + $0x118] sm:$0xff]
    %v128 = vld [vmem:[#allocation5 + $0x120] sm:$0xff]
    %v129 = vld [vmem:[#allocation5 + $0x128] sm:$0xff]
    %v130 = vld [vmem:[#allocation5 + $0x130] sm:$0xff]
    %v131 = vld [vmem:[#allocation5 + $0x138] sm:$0xff]
    %v132 = vld [vmem:[#allocation5 + $0x140] sm:$0xff]
    %v133 = vld [vmem:[#allocation5 + $0x148] sm:$0xff]
    %v134 = vld [vmem:[#allocation5 + $0x150] sm:$0xff]
    %v135 = vld [vmem:[#allocation5 + $0x158] sm:$0xff]
    %v136 = vld [vmem:[#allocation5 + $0x160] sm:$0xff]
    %v137 = vld [vmem:[#allocation5 + $0x168] sm:$0xff]
    %v138 = vld [vmem:[#allocation5 + $0x170] sm:$0xff]
    %v139 = vld [vmem:[#allocation5 + $0x178] sm:$0xff]
    %v140 = vld [vmem:[#allocation5 + $0x180] sm:$0xff]
    %v141 = vld [vmem:[#allocation5 + $0x188] sm:$0xff]
    %v142 = vld [vmem:[#allocation5 + $0x190] sm:$0xff]
    %v143 = vld [vmem:[#allocation5 + $0x198] sm:$0xff]
    %v144 = vld [vmem:[#allocation5 + $0x1a0] sm:$0xff]
    %v145 = vld [vmem:[#allocation5 + $0x1a8] sm:$0xff]
    %v146 = vld [vmem:[#allocation5 + $0x1b0] sm:$0xff]
    %v147 = vld [vmem:[#allocation5 + $0x1b8] sm:$0xff]
    %v148 = vld [vmem:[#allocation5 + $0x1c0] sm:$0xff]
    %v149 = vld [vmem:[#allocation5 + $0x1c8] sm:$0xff]
    %v150 = vld [vmem:[#allocation5 + $0x1d0] sm:$0xff]
    %v151 = vld [vmem:[#allocation5 + $0x1d8] sm:$0xff]
    %v152 = vld [vmem:[#allocation5 + $0x1e0] sm:$0xff]
    %v153 = vld [vmem:[#allocation5 + $0x1e8] sm:$0xff]
    %v154 = vld [vmem:[#allocation5 + $0x1f0] sm:$0xff]
    %v155 = vld [vmem:[#allocation5 + $0x1f8] sm:$0xff]
    %v156 = vld [vmem:[#allocation5 + $0x200] sm:$0xff]
    %v157 = vld [vmem:[#allocation5 + $0x208] sm:$0xff]
    %v158 = vld [vmem:[#allocation5 + $0x210] sm:$0xff]
    %v159 = vld [vmem:[#allocation5 + $0x218] sm:$0xff]
    %v160 = vld [vmem:[#allocation5 + $0x220] sm:$0xff]
    %v161 = vld [vmem:[#allocation5 + $0x228] sm:$0xff]
    %v162 = vld [vmem:[#allocation5 + $0x230] sm:$0xff]
    %v163 = vld [vmem:[#allocation5 + $0x238] sm:$0xff]
    %v164 = vld [vmem:[#allocation5 + $0x240] sm:$0xff]
    %v165 = vld [vmem:[#allocation5 + $0x248] sm:$0xff]
    %v166 = vld [vmem:[#allocation5 + $0x250] sm:$0xff]
    %v167 = vld [vmem:[#allocation5 + $0x258] sm:$0xff]
    %v168 = vld [vmem:[#allocation5 + $0x260] sm:$0xff]
    %v169 = vld [vmem:[#allocation5 + $0x268] sm:$0xff]
    %v170 = vld [vmem:[#allocation5 + $0x270] sm:$0xff]
    %v171 = vld [vmem:[#allocation5 + $0x278] sm:$0xff]
    %v172 = vld [vmem:[#allocation5 + $0x280] sm:$0xff]
    %v173 = vld [vmem:[#allocation5 + $0x288] sm:$0xff]
    %v174 = vld [vmem:[#allocation5 + $0x290] sm:$0xff]
    %v175 = vld [vmem:[#allocation5 + $0x298] sm:$0xff]
    %v176 = vld [vmem:[#allocation5 + $0x2a0] sm:$0xff]
    %v177 = vld [vmem:[#allocation5 + $0x2a8] sm:$0xff]
    %v178 = vld [vmem:[#allocation5 + $0x2b0] sm:$0xff]
    %v179 = vld [vmem:[#allocation5 + $0x2b8] sm:$0xff]
    %v180 = vld [vmem:[#allocation5 + $0x2c0] sm:$0xff]
    %v181 = vld [vmem:[#allocation5 + $0x2c8] sm:$0xff]
    %v182 = vld [vmem:[#allocation5 + $0x2d0] sm:$0xff]
    %v183 = vld [vmem:[#allocation5 + $0x2d8] sm:$0xff]
    %v184 = vld [vmem:[#allocation5 + $0x2e0] sm:$0xff]
    %v185 = vld [vmem:[#allocation5 + $0x2e8] sm:$0xff]
    %v186 = vld [vmem:[#allocation5 + $0x2f0] sm:$0xff]
    %v187 = vld [vmem:[#allocation5 + $0x2f8] sm:$0xff]
    %v188 = vld [vmem:[#allocation5 + $0x300] sm:$0xff]
    %v189 = vld [vmem:[#allocation5 + $0x308] sm:$0xff]
    %v190 = vld [vmem:[#allocation5 + $0x310] sm:$0xff]
    %v191 = vld [vmem:[#allocation5 + $0x318] sm:$0xff]
    %v192 = vld [vmem:[#allocation5 + $0x320] sm:$0xff]
    %v193 = vld [vmem:[#allocation5 + $0x328] sm:$0xff]
    %v194 = vld [vmem:[#allocation5 + $0x330] sm:$0xff]
    %v195 = vld [vmem:[#allocation5 + $0x338] sm:$0xff]
    %v196 = vld [vmem:[#allocation5 + $0x340] sm:$0xff]
    %v197 = vld [vmem:[#allocation5 + $0x348] sm:$0xff]
    %v198 = vld [vmem:[#allocation5 + $0x350] sm:$0xff]
    %v199 = vld [vmem:[#allocation5 + $0x358] sm:$0xff]
    %v200 = vld [vmem:[#allocation5 + $0x360] sm:$0xff]
    %v201 = vld [vmem:[#allocation5 + $0x368] sm:$0xff]
    %v202 = vld [vmem:[#allocation5 + $0x370] sm:$0xff]
    %v203 = vld [vmem:[#allocation5 + $0x378] sm:$0xff]
    %v204 = vld [vmem:[#allocation5 + $0x380] sm:$0xff]
    %v205 = vld [vmem:[#allocation5 + $0x388] sm:$0xff]
    %v206 = vld [vmem:[#allocation5 + $0x390] sm:$0xff]
    %v207 = vld [vmem:[#allocation5 + $0x398] sm:$0xff]
    %v208 = vld [vmem:[#allocation5 + $0x3a0] sm:$0xff]
    %v209 = vld [vmem:[#allocation5 + $0x3a8] sm:$0xff]
    %v210 = vld [vmem:[#allocation5 + $0x3b0] sm:$0xff]
    %v211 = vld [vmem:[#allocation5 + $0x3b8] sm:$0xff]
    %v212 = vld [vmem:[#allocation5 + $0x3c0] sm:$0xff]
    %v213 = vld [vmem:[#allocation5 + $0x3c8] sm:$0xff]
    %v214 = vld [vmem:[#allocation5 + $0x3d0] sm:$0xff]
    %v215 = vld [vmem:[#allocation5 + $0x3d8] sm:$0xff]
    %v216 = vld [vmem:[#allocation5 + $0x3e0] sm:$0xff]
    %v217 = vld [vmem:[#allocation5 + $0x3e8] sm:$0xff]
    %v218 = vld [vmem:[#allocation5 + $0x3f0] sm:$0xff]
    %v219 = vld [vmem:[#allocation5 + $0x3f8] sm:$0xff]
    %v220 = vld [vmem:[#allocation5 + $0x400] sm:$0xff]
    %v221 = vld [vmem:[#allocation5 + $0x408] sm:$0xff]
    %v222 = vld [vmem:[#allocation5 + $0x410] sm:$0xff]
    %v223 = vld [vmem:[#allocation5 + $0x418] sm:$0xff]
    %v224 = vld [vmem:[#allocation5 + $0x420] sm:$0xff]
    %v225 = vld [vmem:[#allocation5 + $0x428] sm:$0xff]
    %v226 = vld [vmem:[#allocation5 + $0x430] sm:$0xff]
    %v227 = vld [vmem:[#allocation5 + $0x438] sm:$0xff]
    %v228 = vld [vmem:[#allocation5 + $0x440] sm:$0xff]
    %v229 = vld [vmem:[#allocation5 + $0x448] sm:$0xff]
    %v230 = vld [vmem:[#allocation5 + $0x450] sm:$0xff]
    %v231 = vld [vmem:[#allocation5 + $0x458] sm:$0xff]
    %v232 = vld [vmem:[#allocation5 + $0x460] sm:$0xff]
    %v233 = vld [vmem:[#allocation5 + $0x468] sm:$0xff]
    %v234 = vld [vmem:[#allocation5 + $0x470] sm:$0xff]
    %v235 = vld [vmem:[#allocation5 + $0x478] sm:$0xff]
    %v236 = vld [vmem:[#allocation5 + $0x480] sm:$0xff]
    %v237 = vld [vmem:[#allocation5 + $0x488] sm:$0xff]
    %v238 = vld [vmem:[#allocation5 + $0x490] sm:$0xff]
    %v239 = vld [vmem:[#allocation5 + $0x498] sm:$0xff]
    %v240 = vld [vmem:[#allocation5 + $0x4a0] sm:$0xff]
    %v241 = vld [vmem:[#allocation5 + $0x4a8] sm:$0xff]
    %v242 = vld [vmem:[#allocation5 + $0x4b0] sm:$0xff]
    %v243 = vld [vmem:[#allocation5 + $0x4b8] sm:$0xff]
    %v244 = vld [vmem:[#allocation5 + $0x4c0] sm:$0xff]
    %v245 = vld [vmem:[#allocation5 + $0x4c8] sm:$0xff]
    %v246 = vld [vmem:[#allocation5 + $0x4d0] sm:$0xff]
    %v247 = vld [vmem:[#allocation5 + $0x4d8] sm:$0xff]
    %v248 = vld [vmem:[#allocation5 + $0x4e0] sm:$0xff]
    %v249 = vld [vmem:[#allocation5 + $0x4e8] sm:$0xff]
    %v250 = vld [vmem:[#allocation5 + $0x4f0] sm:$0xff]
    %v251 = vld [vmem:[#allocation5 + $0x4f8] sm:$0xff]
    %v252 = vld [vmem:[#allocation5 + $0x500] sm:$0xff]
    %v253 = vld [vmem:[#allocation5 + $0x508] sm:$0xff]
    %v254 = vld [vmem:[#allocation5 + $0x510] sm:$0xff]
    %v255 = vld [vmem:[#allocation5 + $0x518] sm:$0xff]
    %v256 = vld [vmem:[#allocation5 + $0x520] sm:$0xff]
    %v257 = vld [vmem:[#allocation5 + $0x528] sm:$0xff]
    %v258 = vld [vmem:[#allocation5 + $0x530] sm:$0xff]
    %v259 = vld [vmem:[#allocation5 + $0x538] sm:$0xff]
    %v260 = vld [vmem:[#allocation5 + $0x540] sm:$0xff]
    %v261 = vld [vmem:[#allocation5 + $0x548] sm:$0xff]
    %v262 = vld [vmem:[#allocation5 + $0x550] sm:$0xff]
    %v263 = vld [vmem:[#allocation5 + $0x558] sm:$0xff]
    %v264 = vld [vmem:[#allocation5 + $0x560] sm:$0xff]
    %v265 = vld [vmem:[#allocation5 + $0x568] sm:$0xff]
    %v266 = vld [vmem:[#allocation5 + $0x570] sm:$0xff]
    %v267 = vld [vmem:[#allocation5 + $0x578] sm:$0xff]
    %v268 = vld [vmem:[#allocation5 + $0x580] sm:$0xff]
    %v269 = vld [vmem:[#allocation5 + $0x588] sm:$0xff]
    %v270 = vld [vmem:[#allocation5 + $0x590] sm:$0xff]
    %v271 = vld [vmem:[#allocation5 + $0x598] sm:$0xff]
    %v272 = vld [vmem:[#allocation5 + $0x5a0] sm:$0xff]
    %v273 = vld [vmem:[#allocation5 + $0x5a8] sm:$0xff]
    %v274 = vld [vmem:[#allocation5 + $0x5b0] sm:$0xff]
    %v275 = vld [vmem:[#allocation5 + $0x5b8] sm:$0xff]
    %v276 = vld [vmem:[#allocation5 + $0x5c0] sm:$0xff]
    %v277 = vld [vmem:[#allocation5 + $0x5c8] sm:$0xff]
    %v278 = vld [vmem:[#allocation5 + $0x5d0] sm:$0xff]
    %v279 = vld [vmem:[#allocation5 + $0x5d8] sm:$0xff]
    %v280 = vld [vmem:[#allocation5 + $0x5e0] sm:$0xff]
    %v281 = vld [vmem:[#allocation5 + $0x5e8] sm:$0xff]
    %v282 = vld [vmem:[#allocation5 + $0x5f0] sm:$0xff]
    %v283 = vld [vmem:[#allocation5 + $0x5f8] sm:$0xff]
    %v284 = vld [vmem:[#allocation5 + $0x600] sm:$0xff]
    %v285 = vld [vmem:[#allocation5 + $0x608] sm:$0xff]
    %v286 = vld [vmem:[#allocation5 + $0x610] sm:$0xff]
    %v287 = vld [vmem:[#allocation5 + $0x618] sm:$0xff]
    %v288 = vld [vmem:[#allocation5 + $0x620] sm:$0xff]
    %v289 = vld [vmem:[#allocation5 + $0x628] sm:$0xff]
    %v290 = vld [vmem:[#allocation5 + $0x630] sm:$0xff]
    %v291 = vld [vmem:[#allocation5 + $0x638] sm:$0xff]
    %v292 = vld [vmem:[#allocation5 + $0x640] sm:$0xff]
    %v293 = vld [vmem:[#allocation5 + $0x648] sm:$0xff]
    %v294 = vld [vmem:[#allocation5 + $0x650] sm:$0xff]
    %v295 = vld [vmem:[#allocation5 + $0x658] sm:$0xff]
    %v296 = vld [vmem:[#allocation5 + $0x660] sm:$0xff]
    %v297 = vld [vmem:[#allocation5 + $0x668] sm:$0xff]
    %v298 = vld [vmem:[#allocation5 + $0x670] sm:$0xff]
    %v299 = vld [vmem:[#allocation5 + $0x678] sm:$0xff]
    %v300 = vld [vmem:[#allocation5 + $0x680] sm:$0xff]
    %v301 = vld [vmem:[#allocation5 + $0x688] sm:$0xff]
    %v302 = vld [vmem:[#allocation5 + $0x690] sm:$0xff]
    %v303 = vld [vmem:[#allocation5 + $0x698] sm:$0xff]
    %v304 = vld [vmem:[#allocation5 + $0x6a0] sm:$0xff]
    %v305 = vld [vmem:[#allocation5 + $0x6a8] sm:$0xff]
    %v306 = vld [vmem:[#allocation5 + $0x6b0] sm:$0xff]
    %v307 = vld [vmem:[#allocation5 + $0x6b8] sm:$0xff]
    %v308 = vld [vmem:[#allocation5 + $0x6c0] sm:$0xff]
    %v309 = vld [vmem:[#allocation5 + $0x6c8] sm:$0xff]
    %v310 = vld [vmem:[#allocation5 + $0x6d0] sm:$0xff]
    %v311 = vld [vmem:[#allocation5 + $0x6d8] sm:$0xff]
    %v312 = vld [vmem:[#allocation5 + $0x6e0] sm:$0xff]
    %v313 = vld [vmem:[#allocation5 + $0x6e8] sm:$0xff]
    %v314 = vld [vmem:[#allocation5 + $0x6f0] sm:$0xff]
    %v315 = vld [vmem:[#allocation5 + $0x6f8] sm:$0xff]
    %v316 = vld [vmem:[#allocation5 + $0x700] sm:$0xff]
    %v317 = vld [vmem:[#allocation5 + $0x708] sm:$0xff]
    %v318 = vld [vmem:[#allocation5 + $0x710] sm:$0xff]
    %v319 = vld [vmem:[#allocation5 + $0x718] sm:$0xff]
    %v320 = vld [vmem:[#allocation5 + $0x720] sm:$0xff]
    %v321 = vld [vmem:[#allocation5 + $0x728] sm:$0xff]
    %v322 = vld [vmem:[#allocation5 + $0x730] sm:$0xff]
    %v323 = vld [vmem:[#allocation5 + $0x738] sm:$0xff]
    %v324 = vld [vmem:[#allocation5 + $0x740] sm:$0xff]
    %v325 = vld [vmem:[#allocation5 + $0x748] sm:$0xff]
    %v326 = vld [vmem:[#allocation5 + $0x750] sm:$0xff]
    %v327 = vld [vmem:[#allocation5 + $0x758] sm:$0xff]
    %v328 = vld [vmem:[#allocation5 + $0x760] sm:$0xff]
    %v329 = vld [vmem:[#allocation5 + $0x768] sm:$0xff]
    %v330 = vld [vmem:[#allocation5 + $0x770] sm:$0xff]
    %v331 = vld [vmem:[#allocation5 + $0x778] sm:$0xff]
    %v332 = vld [vmem:[#allocation5 + $0x780] sm:$0xff]
    %v333 = vld [vmem:[#allocation5 + $0x788] sm:$0xff]
    %v334 = vld [vmem:[#allocation5 + $0x790] sm:$0xff]
    %v335 = vld [vmem:[#allocation5 + $0x798] sm:$0xff]
    %v336 = vld [vmem:[#allocation5 + $0x7a0] sm:$0xff]
    %v337 = vld [vmem:[#allocation5 + $0x7a8] sm:$0xff]
    %v338 = vld [vmem:[#allocation5 + $0x7b0] sm:$0xff]
    %v339 = vld [vmem:[#allocation5 + $0x7b8] sm:$0xff]
    %v340 = vld [vmem:[#allocation5 + $0x7c0] sm:$0xff]
    %v341 = vld [vmem:[#allocation5 + $0x7c8] sm:$0xff]
    %v342 = vld [vmem:[#allocation5 + $0x7d0] sm:$0xff]
    %v343 = vld [vmem:[#allocation5 + $0x7d8] sm:$0xff]
    %v344 = vld [vmem:[#allocation5 + $0x7e0] sm:$0xff]
    %v345 = vld [vmem:[#allocation5 + $0x7e8] sm:$0xff]
    %v346 = vld [vmem:[#allocation5 + $0x7f0] sm:$0xff]
    %v347 = vld [vmem:[#allocation5 + $0x7f8] sm:$0xff]
    %v348 = vld [vmem:[#allocation8] sm:$0xf]
    %v349 = vld [vmem:[#allocation8 + $0x4] sm:$0xf]
    %v350 = vld [vmem:[#allocation8 + $0x8] sm:$0xf]
    %v351 = vld [vmem:[#allocation8 + $0xc] sm:$0xf]
    %v352 = vld [vmem:[#allocation8 + $0x10] sm:$0xf]
    %v353 = vld [vmem:[#allocation8 + $0x14] sm:$0xf]
    %v354 = vld [vmem:[#allocation8 + $0x18] sm:$0xf]
    %v355 = vld [vmem:[#allocation8 + $0x1c] sm:$0xf]
    %v356 = vld [vmem:[#allocation8 + $0x20] sm:$0xf]
    %v357 = vld [vmem:[#allocation8 + $0x24] sm:$0xf]
    %v358 = vld [vmem:[#allocation8 + $0x28] sm:$0xf]
    %v359 = vld [vmem:[#allocation8 + $0x2c] sm:$0xf]
    %v360 = vld [vmem:[#allocation8 + $0x30] sm:$0xf]
    %v361 = vld [vmem:[#allocation8 + $0x34] sm:$0xf]
    %v362 = vld [vmem:[#allocation8 + $0x38] sm:$0xf]
    %v363 = vld [vmem:[#allocation8 + $0x3c] sm:$0xf]
    %v364 = vld [vmem:[#allocation8 + $0x40] sm:$0xf]
    %v365 = vld [vmem:[#allocation8 + $0x44] sm:$0xf]
    %v366 = vld [vmem:[#allocation8 + $0x48] sm:$0xf]
    %v367 = vld [vmem:[#allocation8 + $0x4c] sm:$0xf]
    %v368 = vld [vmem:[#allocation8 + $0x50] sm:$0xf]
    %v369 = vld [vmem:[#allocation8 + $0x54] sm:$0xf]
    %v370 = vld [vmem:[#allocation8 + $0x58] sm:$0xf]
    %v371 = vld [vmem:[#allocation8 + $0x5c] sm:$0xf]
    %v372 = vld [vmem:[#allocation8 + $0x60] sm:$0xf]
    %v373 = vld [vmem:[#allocation8 + $0x64] sm:$0xf]
    %v374 = vld [vmem:[#allocation8 + $0x68] sm:$0xf]
    %v375 = vld [vmem:[#allocation8 + $0x6c] sm:$0xf]
    %v376 = vld [vmem:[#allocation8 + $0x70] sm:$0xf]
    %v377 = vld [vmem:[#allocation8 + $0x74] sm:$0xf]
    %v378 = vld [vmem:[#allocation8 + $0x78] sm:$0xf]
    %v379 = vld [vmem:[#allocation8 + $0x7c] sm:$0xf]
    %v380 = vld [vmem:[#allocation8 + $0x80] sm:$0xf]
    %v381 = vld [vmem:[#allocation8 + $0x84] sm:$0xf]
    %v382 = vld [vmem:[#allocation8 + $0x88] sm:$0xf]
    %v383 = vld [vmem:[#allocation8 + $0x8c] sm:$0xf]
    %v384 = vld [vmem:[#allocation8 + $0x90] sm:$0xf]
    %v385 = vld [vmem:[#allocation8 + $0x94] sm:$0xf]
    %v386 = vld [vmem:[#allocation8 + $0x98] sm:$0xf]
    %v387 = vld [vmem:[#allocation8 + $0x9c] sm:$0xf]
    %v388 = vld [vmem:[#allocation8 + $0xa0] sm:$0xf]
    %v389 = vld [vmem:[#allocation8 + $0xa4] sm:$0xf]
    %v390 = vld [vmem:[#allocation8 + $0xa8] sm:$0xf]
    %v391 = vld [vmem:[#allocation8 + $0xac] sm:$0xf]
    %v392 = vld [vmem:[#allocation8 + $0xb0] sm:$0xf]
    %v393 = vld [vmem:[#allocation8 + $0xb4] sm:$0xf]
    %v394 = vld [vmem:[#allocation8 + $0xb8] sm:$0xf]
    %v395 = vld [vmem:[#allocation8 + $0xbc] sm:$0xf]
    %v396 = vld [vmem:[#allocation8 + $0xc0] sm:$0xf]
    %v397 = vld [vmem:[#allocation8 + $0xc4] sm:$0xf]
    %v398 = vld [vmem:[#allocation8 + $0xc8] sm:$0xf]
    %v399 = vld [vmem:[#allocation8 + $0xcc] sm:$0xf]
    %v400 = vld [vmem:[#allocation8 + $0xd0] sm:$0xf]
    %v401 = vld [vmem:[#allocation8 + $0xd4] sm:$0xf]
    %v402 = vld [vmem:[#allocation8 + $0xd8] sm:$0xf]
    %v403 = vld [vmem:[#allocation8 + $0xdc] sm:$0xf]
    %v404 = vld [vmem:[#allocation8 + $0xe0] sm:$0xf]
    %v405 = vld [vmem:[#allocation8 + $0xe4] sm:$0xf]
    %v406 = vld [vmem:[#allocation8 + $0xe8] sm:$0xf]
    %v407 = vld [vmem:[#allocation8 + $0xec] sm:$0xf]
    %v408 = vld [vmem:[#allocation8 + $0xf0] sm:$0xf]
    %v409 = vld [vmem:[#allocation8 + $0xf4] sm:$0xf]
    %v410 = vld [vmem:[#allocation8 + $0xf8] sm:$0xf]
    %v411 = vld [vmem:[#allocation8 + $0xfc] sm:$0xf]
    %v412 = vld [vmem:[#allocation8 + $0x100] sm:$0xf]
    %v413 = vld [vmem:[#allocation8 + $0x104] sm:$0xf]
    %v414 = vld [vmem:[#allocation8 + $0x108] sm:$0xf]
    %v415 = vld [vmem:[#allocation8 + $0x10c] sm:$0xf]
    %v416 = vld [vmem:[#allocation8 + $0x110] sm:$0xf]
    %v417 = vld [vmem:[#allocation8 + $0x114] sm:$0xf]
    %v418 = vld [vmem:[#allocation8 + $0x118] sm:$0xf]
    %v419 = vld [vmem:[#allocation8 + $0x11c] sm:$0xf]
    %v420 = vld [vmem:[#allocation8 + $0x120] sm:$0xf]
    %v421 = vld [vmem:[#allocation8 + $0x124] sm:$0xf]
    %v422 = vld [vmem:[#allocation8 + $0x128] sm:$0xf]
    %v423 = vld [vmem:[#allocation8 + $0x12c] sm:$0xf]
    %v424 = vld [vmem:[#allocation8 + $0x130] sm:$0xf]
    %v425 = vld [vmem:[#allocation8 + $0x134] sm:$0xf]
    %v426 = vld [vmem:[#allocation8 + $0x138] sm:$0xf]
    %v427 = vld [vmem:[#allocation8 + $0x13c] sm:$0xf]
    %v428 = vld [vmem:[#allocation8 + $0x140] sm:$0xf]
    %v429 = vld [vmem:[#allocation8 + $0x144] sm:$0xf]
    %v430 = vld [vmem:[#allocation8 + $0x148] sm:$0xf]
    %v431 = vld [vmem:[#allocation8 + $0x14c] sm:$0xf]
    %v432 = vld [vmem:[#allocation8 + $0x150] sm:$0xf]
    %v433 = vld [vmem:[#allocation8 + $0x154] sm:$0xf]
    %v434 = vld [vmem:[#allocation8 + $0x158] sm:$0xf]
    %v435 = vld [vmem:[#allocation8 + $0x15c] sm:$0xf]
    %v436 = vld [vmem:[#allocation8 + $0x160] sm:$0xf]
    %v437 = vld [vmem:[#allocation8 + $0x164] sm:$0xf]
    %v438 = vld [vmem:[#allocation8 + $0x168] sm:$0xf]
    %v439 = vld [vmem:[#allocation8 + $0x16c] sm:$0xf]
    %v440 = vld [vmem:[#allocation8 + $0x170] sm:$0xf]
    %v441 = vld [vmem:[#allocation8 + $0x174] sm:$0xf]
    %v442 = vld [vmem:[#allocation8 + $0x178] sm:$0xf]
    %v443 = vld [vmem:[#allocation8 + $0x17c] sm:$0xf]
    %v444 = vld [vmem:[#allocation8 + $0x180] sm:$0xf]
    %v445 = vld [vmem:[#allocation8 + $0x184] sm:$0xf]
    %v446 = vld [vmem:[#allocation8 + $0x188] sm:$0xf]
    %v447 = vld [vmem:[#allocation8 + $0x18c] sm:$0xf]
    %v448 = vld [vmem:[#allocation8 + $0x190] sm:$0xf]
    %v449 = vld [vmem:[#allocation8 + $0x194] sm:$0xf]
    %v450 = vld [vmem:[#allocation8 + $0x198] sm:$0xf]
    %v451 = vld [vmem:[#allocation8 + $0x19c] sm:$0xf]
    %v452 = vld [vmem:[#allocation8 + $0x1a0] sm:$0xf]
    %v453 = vld [vmem:[#allocation8 + $0x1a4] sm:$0xf]
    %v454 = vld [vmem:[#allocation8 + $0x1a8] sm:$0xf]
    %v455 = vld [vmem:[#allocation8 + $0x1ac] sm:$0xf]
    %v456 = vld [vmem:[#allocation8 + $0x1b0] sm:$0xf]
    %v457 = vld [vmem:[#allocation8 + $0x1b4] sm:$0xf]
    %v458 = vld [vmem:[#allocation8 + $0x1b8] sm:$0xf]
    %v459 = vld [vmem:[#allocation8 + $0x1bc] sm:$0xf]
    %v460 = vld [vmem:[#allocation8 + $0x1c0] sm:$0xf]
    %v461 = vld [vmem:[#allocation8 + $0x1c4] sm:$0xf]
    %v462 = vld [vmem:[#allocation8 + $0x1c8] sm:$0xf]
    %v463 = vld [vmem:[#allocation8 + $0x1cc] sm:$0xf]
    %v464 = vld [vmem:[#allocation8 + $0x1d0] sm:$0xf]
    %v465 = vld [vmem:[#allocation8 + $0x1d4] sm:$0xf]
    %v466 = vld [vmem:[#allocation8 + $0x1d8] sm:$0xf]
    %v467 = vld [vmem:[#allocation8 + $0x1dc] sm:$0xf]
    %v468 = vld [vmem:[#allocation8 + $0x1e0] sm:$0xf]
    %v469 = vld [vmem:[#allocation8 + $0x1e4] sm:$0xf]
    %v470 = vld [vmem:[#allocation8 + $0x1e8] sm:$0xf]
    %v471 = vld [vmem:[#allocation8 + $0x1ec] sm:$0xf]
    %v472 = vld [vmem:[#allocation8 + $0x1f0] sm:$0xf]
    %v473 = vld [vmem:[#allocation8 + $0x1f4] sm:$0xf]
    %v474 = vld [vmem:[#allocation8 + $0x1f8] sm:$0xf]
    %v475 = vld [vmem:[#allocation8 + $0x1fc] sm:$0xf]
    %v476 = vld [vmem:[#allocation2] sm:$0xff]
    %v477 = vld [vmem:[#allocation2 + $0x8] sm:$0xff]
    %v480 = vcombine.high %v476, %v476
    %v481 = vcombine.high %v477, %v477
    %v484 = vpack.c.bf16 %v476, %v476
    %v485 = vpack.c.bf16 %v480, %v480
    %v486 = vpack.c.bf16 %v477, %v477
    %v487 = vpack.c.bf16 %v481, %v481
    %v488 = vld [vmem:[#allocation7] sm:$0xff]
    %v490 = vlaneseq
    %v491 = vshrl.u32 %v490, 7
    %v492 = vsub.s32 0, %v491
    %v493 = vrot.slane %v488, %v492
    %v494 = vlaneseq
    %v495 = vshrl.u32 %v494, 7
    %v496 = vsub.s32 1, %v495
    %v497 = vrot.slane %v488, %v496
    %v498 = vlaneseq
    %v499 = vshrl.u32 %v498, 7
    %v500 = vsub.s32 2, %v499
    %v501 = vrot.slane %v488, %v500
    %v502 = vlaneseq
    %v503 = vshrl.u32 %v502, 7
    %v504 = vsub.s32 3, %v503
    %v505 = vrot.slane %v488, %v504
    %v506 = vlaneseq
    %v507 = vshrl.u32 %v506, 7
    %v508 = vsub.s32 4, %v507
    %v509 = vrot.slane %v488, %v508
    %v510 = vlaneseq
    %v511 = vshrl.u32 %v510, 7
    %v512 = vsub.s32 5, %v511
    %v513 = vrot.slane %v488, %v512
    %v514 = vlaneseq
    %v515 = vshrl.u32 %v514, 7
    %v516 = vsub.s32 6, %v515
    %v517 = vrot.slane %v488, %v516
    %v518 = vlaneseq
    %v519 = vshrl.u32 %v518, 7
    %v520 = vsub.s32 7, %v519
    %v521 = vrot.slane %v488, %v520
    %v786 = vunpack.c.l.b16 %v92
    %v787 = vunpack.c.h.b16 %v92
    %v788 = vunpack.c.l.b16 %v93
    %v789 = vunpack.c.h.b16 %v93
    %v790 = vunpack.c.l.b16 %v94
    %v791 = vunpack.c.h.b16 %v94
    %v792 = vunpack.c.l.b16 %v95
    %v793 = vunpack.c.h.b16 %v95
    %v794 = vunpack.c.l.b16 %v96
    %v795 = vunpack.c.h.b16 %v96
    %v796 = vunpack.c.l.b16 %v97
    %v797 = vunpack.c.h.b16 %v97
    %v798 = vunpack.c.l.b16 %v98
    %v799 = vunpack.c.h.b16 %v98
    %v800 = vunpack.c.l.b16 %v99
    %v801 = vunpack.c.h.b16 %v99
    %v802 = vunpack.c.l.b16 %v100
    %v803 = vunpack.c.h.b16 %v100
    %v804 = vunpack.c.l.b16 %v101
    %v805 = vunpack.c.h.b16 %v101
    %v806 = vunpack.c.l.b16 %v102
    %v807 = vunpack.c.h.b16 %v102
    %v808 = vunpack.c.l.b16 %v103
    %v809 = vunpack.c.h.b16 %v103
    %v810 = vunpack.c.l.b16 %v104
    %v811 = vunpack.c.h.b16 %v104
    %v812 = vunpack.c.l.b16 %v105
    %v813 = vunpack.c.h.b16 %v105
    %v814 = vunpack.c.l.b16 %v106
    %v815 = vunpack.c.h.b16 %v106
    %v816 = vunpack.c.l.b16 %v107
    %v817 = vunpack.c.h.b16 %v107
    %v818 = vunpack.c.l.b16 %v108
    %v819 = vunpack.c.h.b16 %v108
    %v820 = vunpack.c.l.b16 %v109
    %v821 = vunpack.c.h.b16 %v109
    %v822 = vunpack.c.l.b16 %v110
    %v823 = vunpack.c.h.b16 %v110
    %v824 = vunpack.c.l.b16 %v111
    %v825 = vunpack.c.h.b16 %v111
    %v826 = vunpack.c.l.b16 %v112
    %v827 = vunpack.c.h.b16 %v112
    %v828 = vunpack.c.l.b16 %v113
    %v829 = vunpack.c.h.b16 %v113
    %v830 = vunpack.c.l.b16 %v114
    %v831 = vunpack.c.h.b16 %v114
    %v832 = vunpack.c.l.b16 %v115
    %v833 = vunpack.c.h.b16 %v115
    %v834 = vunpack.c.l.b16 %v116
    %v835 = vunpack.c.h.b16 %v116
    %v836 = vunpack.c.l.b16 %v117
    %v837 = vunpack.c.h.b16 %v117
    %v838 = vunpack.c.l.b16 %v118
    %v839 = vunpack.c.h.b16 %v118
    %v840 = vunpack.c.l.b16 %v119
    %v841 = vunpack.c.h.b16 %v119
    %v842 = vunpack.c.l.b16 %v120
    %v843 = vunpack.c.h.b16 %v120
    %v844 = vunpack.c.l.b16 %v121
    %v845 = vunpack.c.h.b16 %v121
    %v846 = vunpack.c.l.b16 %v122
    %v847 = vunpack.c.h.b16 %v122
    %v848 = vunpack.c.l.b16 %v123
    %v849 = vunpack.c.h.b16 %v123
    %v850 = vunpack.c.l.b16 %v124
    %v851 = vunpack.c.h.b16 %v124
    %v852 = vunpack.c.l.b16 %v125
    %v853 = vunpack.c.h.b16 %v125
    %v854 = vunpack.c.l.b16 %v126
    %v855 = vunpack.c.h.b16 %v126
    %v856 = vunpack.c.l.b16 %v127
    %v857 = vunpack.c.h.b16 %v127
    %v858 = vunpack.c.l.b16 %v128
    %v859 = vunpack.c.h.b16 %v128
    %v860 = vunpack.c.l.b16 %v129
    %v861 = vunpack.c.h.b16 %v129
    %v862 = vunpack.c.l.b16 %v130
    %v863 = vunpack.c.h.b16 %v130
    %v864 = vunpack.c.l.b16 %v131
    %v865 = vunpack.c.h.b16 %v131
    %v866 = vunpack.c.l.b16 %v132
    %v867 = vunpack.c.h.b16 %v132
    %v868 = vunpack.c.l.b16 %v133
    %v869 = vunpack.c.h.b16 %v133
    %v870 = vunpack.c.l.b16 %v134
    %v871 = vunpack.c.h.b16 %v134
    %v872 = vunpack.c.l.b16 %v135
    %v873 = vunpack.c.h.b16 %v135
    %v874 = vunpack.c.l.b16 %v136
    %v875 = vunpack.c.h.b16 %v136
    %v876 = vunpack.c.l.b16 %v137
    %v877 = vunpack.c.h.b16 %v137
    %v878 = vunpack.c.l.b16 %v138
    %v879 = vunpack.c.h.b16 %v138
    %v880 = vunpack.c.l.b16 %v139
    %v881 = vunpack.c.h.b16 %v139
    %v882 = vunpack.c.l.b16 %v140
    %v883 = vunpack.c.h.b16 %v140
    %v884 = vunpack.c.l.b16 %v141
    %v885 = vunpack.c.h.b16 %v141
    %v886 = vunpack.c.l.b16 %v142
    %v887 = vunpack.c.h.b16 %v142
    %v888 = vunpack.c.l.b16 %v143
    %v889 = vunpack.c.h.b16 %v143
    %v890 = vunpack.c.l.b16 %v144
    %v891 = vunpack.c.h.b16 %v144
    %v892 = vunpack.c.l.b16 %v145
    %v893 = vunpack.c.h.b16 %v145
    %v894 = vunpack.c.l.b16 %v146
    %v895 = vunpack.c.h.b16 %v146
    %v896 = vunpack.c.l.b16 %v147
    %v897 = vunpack.c.h.b16 %v147
    %v898 = vunpack.c.l.b16 %v148
    %v899 = vunpack.c.h.b16 %v148
    %v900 = vunpack.c.l.b16 %v149
    %v901 = vunpack.c.h.b16 %v149
    %v902 = vunpack.c.l.b16 %v150
    %v903 = vunpack.c.h.b16 %v150
    %v904 = vunpack.c.l.b16 %v151
    %v905 = vunpack.c.h.b16 %v151
    %v906 = vunpack.c.l.b16 %v152
    %v907 = vunpack.c.h.b16 %v152
    %v908 = vunpack.c.l.b16 %v153
    %v909 = vunpack.c.h.b16 %v153
    %v910 = vunpack.c.l.b16 %v154
    %v911 = vunpack.c.h.b16 %v154
    %v912 = vunpack.c.l.b16 %v155
    %v913 = vunpack.c.h.b16 %v155
    %v914 = vunpack.c.l.b16 %v156
    %v915 = vunpack.c.h.b16 %v156
    %v916 = vunpack.c.l.b16 %v157
    %v917 = vunpack.c.h.b16 %v157
    %v918 = vunpack.c.l.b16 %v158
    %v919 = vunpack.c.h.b16 %v158
    %v920 = vunpack.c.l.b16 %v159
    %v921 = vunpack.c.h.b16 %v159
    %v922 = vunpack.c.l.b16 %v160
    %v923 = vunpack.c.h.b16 %v160
    %v924 = vunpack.c.l.b16 %v161
    %v925 = vunpack.c.h.b16 %v161
    %v926 = vunpack.c.l.b16 %v162
    %v927 = vunpack.c.h.b16 %v162
    %v928 = vunpack.c.l.b16 %v163
    %v929 = vunpack.c.h.b16 %v163
    %v930 = vunpack.c.l.b16 %v164
    %v931 = vunpack.c.h.b16 %v164
    %v932 = vunpack.c.l.b16 %v165
    %v933 = vunpack.c.h.b16 %v165
    %v934 = vunpack.c.l.b16 %v166
    %v935 = vunpack.c.h.b16 %v166
    %v936 = vunpack.c.l.b16 %v167
    %v937 = vunpack.c.h.b16 %v167
    %v938 = vunpack.c.l.b16 %v168
    %v939 = vunpack.c.h.b16 %v168
    %v940 = vunpack.c.l.b16 %v169
    %v941 = vunpack.c.h.b16 %v169
    %v942 = vunpack.c.l.b16 %v170
    %v943 = vunpack.c.h.b16 %v170
    %v944 = vunpack.c.l.b16 %v171
    %v945 = vunpack.c.h.b16 %v171
    %v946 = vunpack.c.l.b16 %v172
    %v947 = vunpack.c.h.b16 %v172
    %v948 = vunpack.c.l.b16 %v173
    %v949 = vunpack.c.h.b16 %v173
    %v950 = vunpack.c.l.b16 %v174
    %v951 = vunpack.c.h.b16 %v174
    %v952 = vunpack.c.l.b16 %v175
    %v953 = vunpack.c.h.b16 %v175
    %v954 = vunpack.c.l.b16 %v176
    %v955 = vunpack.c.h.b16 %v176
    %v956 = vunpack.c.l.b16 %v177
    %v957 = vunpack.c.h.b16 %v177
    %v958 = vunpack.c.l.b16 %v178
    %v959 = vunpack.c.h.b16 %v178
    %v960 = vunpack.c.l.b16 %v179
    %v961 = vunpack.c.h.b16 %v179
    %v962 = vunpack.c.l.b16 %v180
    %v963 = vunpack.c.h.b16 %v180
    %v964 = vunpack.c.l.b16 %v181
    %v965 = vunpack.c.h.b16 %v181
    %v966 = vunpack.c.l.b16 %v182
    %v967 = vunpack.c.h.b16 %v182
    %v968 = vunpack.c.l.b16 %v183
    %v969 = vunpack.c.h.b16 %v183
    %v970 = vunpack.c.l.b16 %v184
    %v971 = vunpack.c.h.b16 %v184
    %v972 = vunpack.c.l.b16 %v185
    %v973 = vunpack.c.h.b16 %v185
    %v974 = vunpack.c.l.b16 %v186
    %v975 = vunpack.c.h.b16 %v186
    %v976 = vunpack.c.l.b16 %v187
    %v977 = vunpack.c.h.b16 %v187
    %v978 = vunpack.c.l.b16 %v188
    %v979 = vunpack.c.h.b16 %v188
    %v980 = vunpack.c.l.b16 %v189
    %v981 = vunpack.c.h.b16 %v189
    %v982 = vunpack.c.l.b16 %v190
    %v983 = vunpack.c.h.b16 %v190
    %v984 = vunpack.c.l.b16 %v191
    %v985 = vunpack.c.h.b16 %v191
    %v986 = vunpack.c.l.b16 %v192
    %v987 = vunpack.c.h.b16 %v192
    %v988 = vunpack.c.l.b16 %v193
    %v989 = vunpack.c.h.b16 %v193
    %v990 = vunpack.c.l.b16 %v194
    %v991 = vunpack.c.h.b16 %v194
    %v992 = vunpack.c.l.b16 %v195
    %v993 = vunpack.c.h.b16 %v195
    %v994 = vunpack.c.l.b16 %v196
    %v995 = vunpack.c.h.b16 %v196
    %v996 = vunpack.c.l.b16 %v197
    %v997 = vunpack.c.h.b16 %v197
    %v998 = vunpack.c.l.b16 %v198
    %v999 = vunpack.c.h.b16 %v198
    %v1000 = vunpack.c.l.b16 %v199
    %v1001 = vunpack.c.h.b16 %v199
    %v1002 = vunpack.c.l.b16 %v200
    %v1003 = vunpack.c.h.b16 %v200
    %v1004 = vunpack.c.l.b16 %v201
    %v1005 = vunpack.c.h.b16 %v201
    %v1006 = vunpack.c.l.b16 %v202
    %v1007 = vunpack.c.h.b16 %v202
    %v1008 = vunpack.c.l.b16 %v203
    %v1009 = vunpack.c.h.b16 %v203
    %v1010 = vunpack.c.l.b16 %v204
    %v1011 = vunpack.c.h.b16 %v204
    %v1012 = vunpack.c.l.b16 %v205
    %v1013 = vunpack.c.h.b16 %v205
    %v1014 = vunpack.c.l.b16 %v206
    %v1015 = vunpack.c.h.b16 %v206
    %v1016 = vunpack.c.l.b16 %v207
    %v1017 = vunpack.c.h.b16 %v207
    %v1018 = vunpack.c.l.b16 %v208
    %v1019 = vunpack.c.h.b16 %v208
    %v1020 = vunpack.c.l.b16 %v209
    %v1021 = vunpack.c.h.b16 %v209
    %v1022 = vunpack.c.l.b16 %v210
    %v1023 = vunpack.c.h.b16 %v210
    %v1024 = vunpack.c.l.b16 %v211
    %v1025 = vunpack.c.h.b16 %v211
    %v1026 = vunpack.c.l.b16 %v212
    %v1027 = vunpack.c.h.b16 %v212
    %v1028 = vunpack.c.l.b16 %v213
    %v1029 = vunpack.c.h.b16 %v213
    %v1030 = vunpack.c.l.b16 %v214
    %v1031 = vunpack.c.h.b16 %v214
    %v1032 = vunpack.c.l.b16 %v215
    %v1033 = vunpack.c.h.b16 %v215
    %v1034 = vunpack.c.l.b16 %v216
    %v1035 = vunpack.c.h.b16 %v216
    %v1036 = vunpack.c.l.b16 %v217
    %v1037 = vunpack.c.h.b16 %v217
    %v1038 = vunpack.c.l.b16 %v218
    %v1039 = vunpack.c.h.b16 %v218
    %v1040 = vunpack.c.l.b16 %v219
    %v1041 = vunpack.c.h.b16 %v219
    %v1042 = vunpack.c.l.b16 %v220
    %v1043 = vunpack.c.h.b16 %v220
    %v1044 = vunpack.c.l.b16 %v221
    %v1045 = vunpack.c.h.b16 %v221
    %v1046 = vunpack.c.l.b16 %v222
    %v1047 = vunpack.c.h.b16 %v222
    %v1048 = vunpack.c.l.b16 %v223
    %v1049 = vunpack.c.h.b16 %v223
    %v1050 = vunpack.c.l.b16 %v224
    %v1051 = vunpack.c.h.b16 %v224
    %v1052 = vunpack.c.l.b16 %v225
    %v1053 = vunpack.c.h.b16 %v225
    %v1054 = vunpack.c.l.b16 %v226
    %v1055 = vunpack.c.h.b16 %v226
    %v1056 = vunpack.c.l.b16 %v227
    %v1057 = vunpack.c.h.b16 %v227
    %v1058 = vunpack.c.l.b16 %v228
    %v1059 = vunpack.c.h.b16 %v228
    %v1060 = vunpack.c.l.b16 %v229
    %v1061 = vunpack.c.h.b16 %v229
    %v1062 = vunpack.c.l.b16 %v230
    %v1063 = vunpack.c.h.b16 %v230
    %v1064 = vunpack.c.l.b16 %v231
    %v1065 = vunpack.c.h.b16 %v231
    %v1066 = vunpack.c.l.b16 %v232
    %v1067 = vunpack.c.h.b16 %v232
    %v1068 = vunpack.c.l.b16 %v233
    %v1069 = vunpack.c.h.b16 %v233
    %v1070 = vunpack.c.l.b16 %v234
    %v1071 = vunpack.c.h.b16 %v234
    %v1072 = vunpack.c.l.b16 %v235
    %v1073 = vunpack.c.h.b16 %v235
    %v1074 = vunpack.c.l.b16 %v236
    %v1075 = vunpack.c.h.b16 %v236
    %v1076 = vunpack.c.l.b16 %v237
    %v1077 = vunpack.c.h.b16 %v237
    %v1078 = vunpack.c.l.b16 %v238
    %v1079 = vunpack.c.h.b16 %v238
    %v1080 = vunpack.c.l.b16 %v239
    %v1081 = vunpack.c.h.b16 %v239
    %v1082 = vunpack.c.l.b16 %v240
    %v1083 = vunpack.c.h.b16 %v240
    %v1084 = vunpack.c.l.b16 %v241
    %v1085 = vunpack.c.h.b16 %v241
    %v1086 = vunpack.c.l.b16 %v242
    %v1087 = vunpack.c.h.b16 %v242
    %v1088 = vunpack.c.l.b16 %v243
    %v1089 = vunpack.c.h.b16 %v243
    %v1090 = vunpack.c.l.b16 %v244
    %v1091 = vunpack.c.h.b16 %v244
    %v1092 = vunpack.c.l.b16 %v245
    %v1093 = vunpack.c.h.b16 %v245
    %v1094 = vunpack.c.l.b16 %v246
    %v1095 = vunpack.c.h.b16 %v246
    %v1096 = vunpack.c.l.b16 %v247
    %v1097 = vunpack.c.h.b16 %v247
    %v1098 = vunpack.c.l.b16 %v248
    %v1099 = vunpack.c.h.b16 %v248
    %v1100 = vunpack.c.l.b16 %v249
    %v1101 = vunpack.c.h.b16 %v249
    %v1102 = vunpack.c.l.b16 %v250
    %v1103 = vunpack.c.h.b16 %v250
    %v1104 = vunpack.c.l.b16 %v251
    %v1105 = vunpack.c.h.b16 %v251
    %v1106 = vunpack.c.l.b16 %v252
    %v1107 = vunpack.c.h.b16 %v252
    %v1108 = vunpack.c.l.b16 %v253
    %v1109 = vunpack.c.h.b16 %v253
    %v1110 = vunpack.c.l.b16 %v254
    %v1111 = vunpack.c.h.b16 %v254
    %v1112 = vunpack.c.l.b16 %v255
    %v1113 = vunpack.c.h.b16 %v255
    %v1114 = vunpack.c.l.b16 %v256
    %v1115 = vunpack.c.h.b16 %v256
    %v1116 = vunpack.c.l.b16 %v257
    %v1117 = vunpack.c.h.b16 %v257
    %v1118 = vunpack.c.l.b16 %v258
    %v1119 = vunpack.c.h.b16 %v258
    %v1120 = vunpack.c.l.b16 %v259
    %v1121 = vunpack.c.h.b16 %v259
    %v1122 = vunpack.c.l.b16 %v260
    %v1123 = vunpack.c.h.b16 %v260
    %v1124 = vunpack.c.l.b16 %v261
    %v1125 = vunpack.c.h.b16 %v261
    %v1126 = vunpack.c.l.b16 %v262
    %v1127 = vunpack.c.h.b16 %v262
    %v1128 = vunpack.c.l.b16 %v263
    %v1129 = vunpack.c.h.b16 %v263
    %v1130 = vunpack.c.l.b16 %v264
    %v1131 = vunpack.c.h.b16 %v264
    %v1132 = vunpack.c.l.b16 %v265
    %v1133 = vunpack.c.h.b16 %v265
    %v1134 = vunpack.c.l.b16 %v266
    %v1135 = vunpack.c.h.b16 %v266
    %v1136 = vunpack.c.l.b16 %v267
    %v1137 = vunpack.c.h.b16 %v267
    %v1138 = vunpack.c.l.b16 %v268
    %v1139 = vunpack.c.h.b16 %v268
    %v1140 = vunpack.c.l.b16 %v269
    %v1141 = vunpack.c.h.b16 %v269
    %v1142 = vunpack.c.l.b16 %v270
    %v1143 = vunpack.c.h.b16 %v270
    %v1144 = vunpack.c.l.b16 %v271
    %v1145 = vunpack.c.h.b16 %v271
    %v1146 = vunpack.c.l.b16 %v272
    %v1147 = vunpack.c.h.b16 %v272
    %v1148 = vunpack.c.l.b16 %v273
    %v1149 = vunpack.c.h.b16 %v273
    %v1150 = vunpack.c.l.b16 %v274
    %v1151 = vunpack.c.h.b16 %v274
    %v1152 = vunpack.c.l.b16 %v275
    %v1153 = vunpack.c.h.b16 %v275
    %v1154 = vunpack.c.l.b16 %v276
    %v1155 = vunpack.c.h.b16 %v276
    %v1156 = vunpack.c.l.b16 %v277
    %v1157 = vunpack.c.h.b16 %v277
    %v1158 = vunpack.c.l.b16 %v278
    %v1159 = vunpack.c.h.b16 %v278
    %v1160 = vunpack.c.l.b16 %v279
    %v1161 = vunpack.c.h.b16 %v279
    %v1162 = vunpack.c.l.b16 %v280
    %v1163 = vunpack.c.h.b16 %v280
    %v1164 = vunpack.c.l.b16 %v281
    %v1165 = vunpack.c.h.b16 %v281
    %v1166 = vunpack.c.l.b16 %v282
    %v1167 = vunpack.c.h.b16 %v282
    %v1168 = vunpack.c.l.b16 %v283
    %v1169 = vunpack.c.h.b16 %v283
    %v1170 = vunpack.c.l.b16 %v284
    %v1171 = vunpack.c.h.b16 %v284
    %v1172 = vunpack.c.l.b16 %v285
    %v1173 = vunpack.c.h.b16 %v285
    %v1174 = vunpack.c.l.b16 %v286
    %v1175 = vunpack.c.h.b16 %v286
    %v1176 = vunpack.c.l.b16 %v287
    %v1177 = vunpack.c.h.b16 %v287
    %v1178 = vunpack.c.l.b16 %v288
    %v1179 = vunpack.c.h.b16 %v288
    %v1180 = vunpack.c.l.b16 %v289
    %v1181 = vunpack.c.h.b16 %v289
    %v1182 = vunpack.c.l.b16 %v290
    %v1183 = vunpack.c.h.b16 %v290
    %v1184 = vunpack.c.l.b16 %v291
    %v1185 = vunpack.c.h.b16 %v291
    %v1186 = vunpack.c.l.b16 %v292
    %v1187 = vunpack.c.h.b16 %v292
    %v1188 = vunpack.c.l.b16 %v293
    %v1189 = vunpack.c.h.b16 %v293
    %v1190 = vunpack.c.l.b16 %v294
    %v1191 = vunpack.c.h.b16 %v294
    %v1192 = vunpack.c.l.b16 %v295
    %v1193 = vunpack.c.h.b16 %v295
    %v1194 = vunpack.c.l.b16 %v296
    %v1195 = vunpack.c.h.b16 %v296
    %v1196 = vunpack.c.l.b16 %v297
    %v1197 = vunpack.c.h.b16 %v297
    %v1198 = vunpack.c.l.b16 %v298
    %v1199 = vunpack.c.h.b16 %v298
    %v1200 = vunpack.c.l.b16 %v299
    %v1201 = vunpack.c.h.b16 %v299
    %v1202 = vunpack.c.l.b16 %v300
    %v1203 = vunpack.c.h.b16 %v300
    %v1204 = vunpack.c.l.b16 %v301
    %v1205 = vunpack.c.h.b16 %v301
    %v1206 = vunpack.c.l.b16 %v302
    %v1207 = vunpack.c.h.b16 %v302
    %v1208 = vunpack.c.l.b16 %v303
    %v1209 = vunpack.c.h.b16 %v303
    %v1210 = vunpack.c.l.b16 %v304
    %v1211 = vunpack.c.h.b16 %v304
    %v1212 = vunpack.c.l.b16 %v305
    %v1213 = vunpack.c.h.b16 %v305
    %v1214 = vunpack.c.l.b16 %v306
    %v1215 = vunpack.c.h.b16 %v306
    %v1216 = vunpack.c.l.b16 %v307
    %v1217 = vunpack.c.h.b16 %v307
    %v1218 = vunpack.c.l.b16 %v308
    %v1219 = vunpack.c.h.b16 %v308
    %v1220 = vunpack.c.l.b16 %v309
    %v1221 = vunpack.c.h.b16 %v309
    %v1222 = vunpack.c.l.b16 %v310
    %v1223 = vunpack.c.h.b16 %v310
    %v1224 = vunpack.c.l.b16 %v311
    %v1225 = vunpack.c.h.b16 %v311
    %v1226 = vunpack.c.l.b16 %v312
    %v1227 = vunpack.c.h.b16 %v312
    %v1228 = vunpack.c.l.b16 %v313
    %v1229 = vunpack.c.h.b16 %v313
    %v1230 = vunpack.c.l.b16 %v314
    %v1231 = vunpack.c.h.b16 %v314
    %v1232 = vunpack.c.l.b16 %v315
    %v1233 = vunpack.c.h.b16 %v315
    %v1234 = vunpack.c.l.b16 %v316
    %v1235 = vunpack.c.h.b16 %v316
    %v1236 = vunpack.c.l.b16 %v317
    %v1237 = vunpack.c.h.b16 %v317
    %v1238 = vunpack.c.l.b16 %v318
    %v1239 = vunpack.c.h.b16 %v318
    %v1240 = vunpack.c.l.b16 %v319
    %v1241 = vunpack.c.h.b16 %v319
    %v1242 = vunpack.c.l.b16 %v320
    %v1243 = vunpack.c.h.b16 %v320
    %v1244 = vunpack.c.l.b16 %v321
    %v1245 = vunpack.c.h.b16 %v321
    %v1246 = vunpack.c.l.b16 %v322
    %v1247 = vunpack.c.h.b16 %v322
    %v1248 = vunpack.c.l.b16 %v323
    %v1249 = vunpack.c.h.b16 %v323
    %v1250 = vunpack.c.l.b16 %v324
    %v1251 = vunpack.c.h.b16 %v324
    %v1252 = vunpack.c.l.b16 %v325
    %v1253 = vunpack.c.h.b16 %v325
    %v1254 = vunpack.c.l.b16 %v326
    %v1255 = vunpack.c.h.b16 %v326
    %v1256 = vunpack.c.l.b16 %v327
    %v1257 = vunpack.c.h.b16 %v327
    %v1258 = vunpack.c.l.b16 %v328
    %v1259 = vunpack.c.h.b16 %v328
    %v1260 = vunpack.c.l.b16 %v329
    %v1261 = vunpack.c.h.b16 %v329
    %v1262 = vunpack.c.l.b16 %v330
    %v1263 = vunpack.c.h.b16 %v330
    %v1264 = vunpack.c.l.b16 %v331
    %v1265 = vunpack.c.h.b16 %v331
    %v1266 = vunpack.c.l.b16 %v332
    %v1267 = vunpack.c.h.b16 %v332
    %v1268 = vunpack.c.l.b16 %v333
    %v1269 = vunpack.c.h.b16 %v333
    %v1270 = vunpack.c.l.b16 %v334
    %v1271 = vunpack.c.h.b16 %v334
    %v1272 = vunpack.c.l.b16 %v335
    %v1273 = vunpack.c.h.b16 %v335
    %v1274 = vunpack.c.l.b16 %v336
    %v1275 = vunpack.c.h.b16 %v336
    %v1276 = vunpack.c.l.b16 %v337
    %v1277 = vunpack.c.h.b16 %v337
    %v1278 = vunpack.c.l.b16 %v338
    %v1279 = vunpack.c.h.b16 %v338
    %v1280 = vunpack.c.l.b16 %v339
    %v1281 = vunpack.c.h.b16 %v339
    %v1282 = vunpack.c.l.b16 %v340
    %v1283 = vunpack.c.h.b16 %v340
    %v1284 = vunpack.c.l.b16 %v341
    %v1285 = vunpack.c.h.b16 %v341
    %v1286 = vunpack.c.l.b16 %v342
    %v1287 = vunpack.c.h.b16 %v342
    %v1288 = vunpack.c.l.b16 %v343
    %v1289 = vunpack.c.h.b16 %v343
    %v1290 = vunpack.c.l.b16 %v344
    %v1291 = vunpack.c.h.b16 %v344
    %v1292 = vunpack.c.l.b16 %v345
    %v1293 = vunpack.c.h.b16 %v345
    %v1294 = vunpack.c.l.b16 %v346
    %v1295 = vunpack.c.h.b16 %v346
    %v1296 = vunpack.c.l.b16 %v347
    %v1297 = vunpack.c.h.b16 %v347
    %v1298 = vpack.c.b16 %v794, %v786
    %v1299 = vpack.c.b16 %v795, %v787
    %v1300 = vpack.c.b16 %v796, %v788
    %v1301 = vpack.c.b16 %v797, %v789
    %v1302 = vpack.c.b16 %v798, %v790
    %v1303 = vpack.c.b16 %v799, %v791
    %v1304 = vpack.c.b16 %v800, %v792
    %v1305 = vpack.c.b16 %v801, %v793
    %v1306 = vpack.c.b16 %v810, %v802
    %v1307 = vpack.c.b16 %v811, %v803
    %v1308 = vpack.c.b16 %v812, %v804
    %v1309 = vpack.c.b16 %v813, %v805
    %v1310 = vpack.c.b16 %v814, %v806
    %v1311 = vpack.c.b16 %v815, %v807
    %v1312 = vpack.c.b16 %v816, %v808
    %v1313 = vpack.c.b16 %v817, %v809
    %v1314 = vpack.c.b16 %v826, %v818
    %v1315 = vpack.c.b16 %v827, %v819
    %v1316 = vpack.c.b16 %v828, %v820
    %v1317 = vpack.c.b16 %v829, %v821
    %v1318 = vpack.c.b16 %v830, %v822
    %v1319 = vpack.c.b16 %v831, %v823
    %v1320 = vpack.c.b16 %v832, %v824
    %v1321 = vpack.c.b16 %v833, %v825
    %v1322 = vpack.c.b16 %v842, %v834
    %v1323 = vpack.c.b16 %v843, %v835
    %v1324 = vpack.c.b16 %v844, %v836
    %v1325 = vpack.c.b16 %v845, %v837
    %v1326 = vpack.c.b16 %v846, %v838
    %v1327 = vpack.c.b16 %v847, %v839
    %v1328 = vpack.c.b16 %v848, %v840
    %v1329 = vpack.c.b16 %v849, %v841
    %v1330 = vpack.c.b16 %v858, %v850
    %v1331 = vpack.c.b16 %v859, %v851
    %v1332 = vpack.c.b16 %v860, %v852
    %v1333 = vpack.c.b16 %v861, %v853
    %v1334 = vpack.c.b16 %v862, %v854
    %v1335 = vpack.c.b16 %v863, %v855
    %v1336 = vpack.c.b16 %v864, %v856
    %v1337 = vpack.c.b16 %v865, %v857
    %v1338 = vpack.c.b16 %v874, %v866
    %v1339 = vpack.c.b16 %v875, %v867
    %v1340 = vpack.c.b16 %v876, %v868
    %v1341 = vpack.c.b16 %v877, %v869
    %v1342 = vpack.c.b16 %v878, %v870
    %v1343 = vpack.c.b16 %v879, %v871
    %v1344 = vpack.c.b16 %v880, %v872
    %v1345 = vpack.c.b16 %v881, %v873
    %v1346 = vpack.c.b16 %v890, %v882
    %v1347 = vpack.c.b16 %v891, %v883
    %v1348 = vpack.c.b16 %v892, %v884
    %v1349 = vpack.c.b16 %v893, %v885
    %v1350 = vpack.c.b16 %v894, %v886
    %v1351 = vpack.c.b16 %v895, %v887
    %v1352 = vpack.c.b16 %v896, %v888
    %v1353 = vpack.c.b16 %v897, %v889
    %v1354 = vpack.c.b16 %v906, %v898
    %v1355 = vpack.c.b16 %v907, %v899
    %v1356 = vpack.c.b16 %v908, %v900
    %v1357 = vpack.c.b16 %v909, %v901
    %v1358 = vpack.c.b16 %v910, %v902
    %v1359 = vpack.c.b16 %v911, %v903
    %v1360 = vpack.c.b16 %v912, %v904
    %v1361 = vpack.c.b16 %v913, %v905
    %v1362 = vpack.c.b16 %v922, %v914
    %v1363 = vpack.c.b16 %v923, %v915
    %v1364 = vpack.c.b16 %v924, %v916
    %v1365 = vpack.c.b16 %v925, %v917
    %v1366 = vpack.c.b16 %v926, %v918
    %v1367 = vpack.c.b16 %v927, %v919
    %v1368 = vpack.c.b16 %v928, %v920
    %v1369 = vpack.c.b16 %v929, %v921
    %v1370 = vpack.c.b16 %v938, %v930
    %v1371 = vpack.c.b16 %v939, %v931
    %v1372 = vpack.c.b16 %v940, %v932
    %v1373 = vpack.c.b16 %v941, %v933
    %v1374 = vpack.c.b16 %v942, %v934
    %v1375 = vpack.c.b16 %v943, %v935
    %v1376 = vpack.c.b16 %v944, %v936
    %v1377 = vpack.c.b16 %v945, %v937
    %v1378 = vpack.c.b16 %v954, %v946
    %v1379 = vpack.c.b16 %v955, %v947
    %v1380 = vpack.c.b16 %v956, %v948
    %v1381 = vpack.c.b16 %v957, %v949
    %v1382 = vpack.c.b16 %v958, %v950
    %v1383 = vpack.c.b16 %v959, %v951
    %v1384 = vpack.c.b16 %v960, %v952
    %v1385 = vpack.c.b16 %v961, %v953
    %v1386 = vpack.c.b16 %v970, %v962
    %v1387 = vpack.c.b16 %v971, %v963
    %v1388 = vpack.c.b16 %v972, %v964
    %v1389 = vpack.c.b16 %v973, %v965
    %v1390 = vpack.c.b16 %v974, %v966
    %v1391 = vpack.c.b16 %v975, %v967
    %v1392 = vpack.c.b16 %v976, %v968
    %v1393 = vpack.c.b16 %v977, %v969
    %v1394 = vpack.c.b16 %v986, %v978
    %v1395 = vpack.c.b16 %v987, %v979
    %v1396 = vpack.c.b16 %v988, %v980
    %v1397 = vpack.c.b16 %v989, %v981
    %v1398 = vpack.c.b16 %v990, %v982
    %v1399 = vpack.c.b16 %v991, %v983
    %v1400 = vpack.c.b16 %v992, %v984
    %v1401 = vpack.c.b16 %v993, %v985
    %v1402 = vpack.c.b16 %v1002, %v994
    %v1403 = vpack.c.b16 %v1003, %v995
    %v1404 = vpack.c.b16 %v1004, %v996
    %v1405 = vpack.c.b16 %v1005, %v997
    %v1406 = vpack.c.b16 %v1006, %v998
    %v1407 = vpack.c.b16 %v1007, %v999
    %v1408 = vpack.c.b16 %v1008, %v1000
    %v1409 = vpack.c.b16 %v1009, %v1001
    %v1410 = vpack.c.b16 %v1018, %v1010
    %v1411 = vpack.c.b16 %v1019, %v1011
    %v1412 = vpack.c.b16 %v1020, %v1012
    %v1413 = vpack.c.b16 %v1021, %v1013
    %v1414 = vpack.c.b16 %v1022, %v1014
    %v1415 = vpack.c.b16 %v1023, %v1015
    %v1416 = vpack.c.b16 %v1024, %v1016
    %v1417 = vpack.c.b16 %v1025, %v1017
    %v1418 = vpack.c.b16 %v1034, %v1026
    %v1419 = vpack.c.b16 %v1035, %v1027
    %v1420 = vpack.c.b16 %v1036, %v1028
    %v1421 = vpack.c.b16 %v1037, %v1029
    %v1422 = vpack.c.b16 %v1038, %v1030
    %v1423 = vpack.c.b16 %v1039, %v1031
    %v1424 = vpack.c.b16 %v1040, %v1032
    %v1425 = vpack.c.b16 %v1041, %v1033
    %v1426 = vpack.c.b16 %v1050, %v1042
    %v1427 = vpack.c.b16 %v1051, %v1043
    %v1428 = vpack.c.b16 %v1052, %v1044
    %v1429 = vpack.c.b16 %v1053, %v1045
    %v1430 = vpack.c.b16 %v1054, %v1046
    %v1431 = vpack.c.b16 %v1055, %v1047
    %v1432 = vpack.c.b16 %v1056, %v1048
    %v1433 = vpack.c.b16 %v1057, %v1049
    %v1434 = vpack.c.b16 %v1066, %v1058
    %v1435 = vpack.c.b16 %v1067, %v1059
    %v1436 = vpack.c.b16 %v1068, %v1060
    %v1437 = vpack.c.b16 %v1069, %v1061
    %v1438 = vpack.c.b16 %v1070, %v1062
    %v1439 = vpack.c.b16 %v1071, %v1063
    %v1440 = vpack.c.b16 %v1072, %v1064
    %v1441 = vpack.c.b16 %v1073, %v1065
    %v1442 = vpack.c.b16 %v1082, %v1074
    %v1443 = vpack.c.b16 %v1083, %v1075
    %v1444 = vpack.c.b16 %v1084, %v1076
    %v1445 = vpack.c.b16 %v1085, %v1077
    %v1446 = vpack.c.b16 %v1086, %v1078
    %v1447 = vpack.c.b16 %v1087, %v1079
    %v1448 = vpack.c.b16 %v1088, %v1080
    %v1449 = vpack.c.b16 %v1089, %v1081
    %v1450 = vpack.c.b16 %v1098, %v1090
    %v1451 = vpack.c.b16 %v1099, %v1091
    %v1452 = vpack.c.b16 %v1100, %v1092
    %v1453 = vpack.c.b16 %v1101, %v1093
    %v1454 = vpack.c.b16 %v1102, %v1094
    %v1455 = vpack.c.b16 %v1103, %v1095
    %v1456 = vpack.c.b16 %v1104, %v1096
    %v1457 = vpack.c.b16 %v1105, %v1097
    %v1458 = vpack.c.b16 %v1114, %v1106
    %v1459 = vpack.c.b16 %v1115, %v1107
    %v1460 = vpack.c.b16 %v1116, %v1108
    %v1461 = vpack.c.b16 %v1117, %v1109
    %v1462 = vpack.c.b16 %v1118, %v1110
    %v1463 = vpack.c.b16 %v1119, %v1111
    %v1464 = vpack.c.b16 %v1120, %v1112
    %v1465 = vpack.c.b16 %v1121, %v1113
    %v1466 = vpack.c.b16 %v1130, %v1122
    %v1467 = vpack.c.b16 %v1131, %v1123
    %v1468 = vpack.c.b16 %v1132, %v1124
    %v1469 = vpack.c.b16 %v1133, %v1125
    %v1470 = vpack.c.b16 %v1134, %v1126
    %v1471 = vpack.c.b16 %v1135, %v1127
    %v1472 = vpack.c.b16 %v1136, %v1128
    %v1473 = vpack.c.b16 %v1137, %v1129
    %v1474 = vpack.c.b16 %v1146, %v1138
    %v1475 = vpack.c.b16 %v1147, %v1139
    %v1476 = vpack.c.b16 %v1148, %v1140
    %v1477 = vpack.c.b16 %v1149, %v1141
    %v1478 = vpack.c.b16 %v1150, %v1142
    %v1479 = vpack.c.b16 %v1151, %v1143
    %v1480 = vpack.c.b16 %v1152, %v1144
    %v1481 = vpack.c.b16 %v1153, %v1145
    %v1482 = vpack.c.b16 %v1162, %v1154
    %v1483 = vpack.c.b16 %v1163, %v1155
    %v1484 = vpack.c.b16 %v1164, %v1156
    %v1485 = vpack.c.b16 %v1165, %v1157
    %v1486 = vpack.c.b16 %v1166, %v1158
    %v1487 = vpack.c.b16 %v1167, %v1159
    %v1488 = vpack.c.b16 %v1168, %v1160
    %v1489 = vpack.c.b16 %v1169, %v1161
    %v1490 = vpack.c.b16 %v1178, %v1170
    %v1491 = vpack.c.b16 %v1179, %v1171
    %v1492 = vpack.c.b16 %v1180, %v1172
    %v1493 = vpack.c.b16 %v1181, %v1173
    %v1494 = vpack.c.b16 %v1182, %v1174
    %v1495 = vpack.c.b16 %v1183, %v1175
    %v1496 = vpack.c.b16 %v1184, %v1176
    %v1497 = vpack.c.b16 %v1185, %v1177
    %v1498 = vpack.c.b16 %v1194, %v1186
    %v1499 = vpack.c.b16 %v1195, %v1187
    %v1500 = vpack.c.b16 %v1196, %v1188
    %v1501 = vpack.c.b16 %v1197, %v1189
    %v1502 = vpack.c.b16 %v1198, %v1190
    %v1503 = vpack.c.b16 %v1199, %v1191
    %v1504 = vpack.c.b16 %v1200, %v1192
    %v1505 = vpack.c.b16 %v1201, %v1193
    %v1506 = vpack.c.b16 %v1210, %v1202
    %v1507 = vpack.c.b16 %v1211, %v1203
    %v1508 = vpack.c.b16 %v1212, %v1204
    %v1509 = vpack.c.b16 %v1213, %v1205
    %v1510 = vpack.c.b16 %v1214, %v1206
    %v1511 = vpack.c.b16 %v1215, %v1207
    %v1512 = vpack.c.b16 %v1216, %v1208
    %v1513 = vpack.c.b16 %v1217, %v1209
    %v1514 = vpack.c.b16 %v1226, %v1218
    %v1515 = vpack.c.b16 %v1227, %v1219
    %v1516 = vpack.c.b16 %v1228, %v1220
    %v1517 = vpack.c.b16 %v1229, %v1221
    %v1518 = vpack.c.b16 %v1230, %v1222
    %v1519 = vpack.c.b16 %v1231, %v1223
    %v1520 = vpack.c.b16 %v1232, %v1224
    %v1521 = vpack.c.b16 %v1233, %v1225
    %v1522 = vpack.c.b16 %v1242, %v1234
    %v1523 = vpack.c.b16 %v1243, %v1235
    %v1524 = vpack.c.b16 %v1244, %v1236
    %v1525 = vpack.c.b16 %v1245, %v1237
    %v1526 = vpack.c.b16 %v1246, %v1238
    %v1527 = vpack.c.b16 %v1247, %v1239
    %v1528 = vpack.c.b16 %v1248, %v1240
    %v1529 = vpack.c.b16 %v1249, %v1241
    %v1530 = vpack.c.b16 %v1258, %v1250
    %v1531 = vpack.c.b16 %v1259, %v1251
    %v1532 = vpack.c.b16 %v1260, %v1252
    %v1533 = vpack.c.b16 %v1261, %v1253
    %v1534 = vpack.c.b16 %v1262, %v1254
    %v1535 = vpack.c.b16 %v1263, %v1255
    %v1536 = vpack.c.b16 %v1264, %v1256
    %v1537 = vpack.c.b16 %v1265, %v1257
    %v1538 = vpack.c.b16 %v1274, %v1266
    %v1539 = vpack.c.b16 %v1275, %v1267
    %v1540 = vpack.c.b16 %v1276, %v1268
    %v1541 = vpack.c.b16 %v1277, %v1269
    %v1542 = vpack.c.b16 %v1278, %v1270
    %v1543 = vpack.c.b16 %v1279, %v1271
    %v1544 = vpack.c.b16 %v1280, %v1272
    %v1545 = vpack.c.b16 %v1281, %v1273
    %v1546 = vpack.c.b16 %v1290, %v1282
    %v1547 = vpack.c.b16 %v1291, %v1283
    %v1548 = vpack.c.b16 %v1292, %v1284
    %v1549 = vpack.c.b16 %v1293, %v1285
    %v1550 = vpack.c.b16 %v1294, %v1286
    %v1551 = vpack.c.b16 %v1295, %v1287
    %v1552 = vpack.c.b16 %v1296, %v1288
    %v1553 = vpack.c.b16 %v1297, %v1289
    %1810 = vmatprep.subr.bf16.mxu0 %v1355
    %1811 = vmatpush1.bf16.msra.mxu0 %v1354
    %1812 = vmatprep.subr.bf16.mxu0 %v1347
    %1813 = vmatpush1.bf16.msra.mxu0 %v1346
    %1814 = vmatprep.subr.bf16.mxu0 %v1339
    %1815 = vmatpush1.bf16.msra.mxu0 %v1338
    %1816 = vmatprep.subr.bf16.mxu0 %v1331
    %1817 = vmatpush1.bf16.msra.mxu0 %v1330
    %1818 = vmatprep.subr.bf16.mxu0 %v1323
    %1819 = vmatpush1.bf16.msra.mxu0 %v1322
    %1820 = vmatprep.subr.bf16.mxu0 %v1315
    %1821 = vmatpush1.bf16.msra.mxu0 %v1314
    %1822 = vmatprep.subr.bf16.mxu0 %v1307
    %1823 = vmatpush1.bf16.msra.mxu0 %v1306
    %1824 = vmatprep.subr.bf16.mxu0 %v1299
    %1825 = vmatpush1.bf16.msra.mxu0 %v1298
    %1826 = vmatprep.subr.bf16.mxu0 %v1419
    %1827 = vmatpush2.bf16.msra.mxu0 %v1418
    %1828 = vmatprep.subr.bf16.mxu0 %v1411
    %1829 = vmatpush2.bf16.msra.mxu0 %v1410
    %1830 = vmatprep.subr.bf16.mxu0 %v1403
    %1831 = vmatpush2.bf16.msra.mxu0 %v1402
    %1832 = vmatprep.subr.bf16.mxu0 %v1395
    %1833 = vmatpush2.bf16.msra.mxu0 %v1394
    %1834 = vmatprep.subr.bf16.mxu0 %v1387
    %1835 = vmatpush2.bf16.msra.mxu0 %v1386
    %1836 = vmatprep.subr.bf16.mxu0 %v1379
    %1837 = vmatpush2.bf16.msra.mxu0 %v1378
    %1838 = vmatprep.subr.bf16.mxu0 %v1371
    %1839 = vmatpush2.bf16.msra.mxu0 %v1370
    %1840 = vmatprep.subr.bf16.mxu0 %v1363
    %1841 = vmatpush2.bf16.msra.mxu0 %v1362
    %1842 = vmatprep.mubr.bf16.mxu0 %v485
    %1843 = vmatmul.mubr.bf16.gmra.mxu0 %v484
    %v1844 = vpop.f32.mrf.mxu0
    %v1845 = vadd.f32 %v493, %v1844
    %v1846 = vpop.f32.mrf.mxu0
    %v1847 = vadd.f32 %v497, %v1846
    %v1848 = vpop.f32.mrf.mxu0
    %v1849 = vpop.f32.mrf.mxu0
    %1850 = vdwg.mxu0
    %1851 = vmatprep.subr.bf16.mxu0 %v1483
    %1852 = vmatpush1.bf16.msra.mxu0 %v1482
    %1853 = vmatprep.subr.bf16.mxu0 %v1475
    %1854 = vmatpush1.bf16.msra.mxu0 %v1474
    %1855 = vmatprep.subr.bf16.mxu0 %v1467
    %1856 = vmatpush1.bf16.msra.mxu0 %v1466
    %1857 = vmatprep.subr.bf16.mxu0 %v1459
    %1858 = vmatpush1.bf16.msra.mxu0 %v1458
    %1859 = vmatprep.subr.bf16.mxu0 %v1451
    %1860 = vmatpush1.bf16.msra.mxu0 %v1450
    %1861 = vmatprep.subr.bf16.mxu0 %v1443
    %1862 = vmatpush1.bf16.msra.mxu0 %v1442
    %1863 = vmatprep.subr.bf16.mxu0 %v1435
    %1864 = vmatpush1.bf16.msra.mxu0 %v1434
    %1865 = vmatprep.subr.bf16.mxu0 %v1427
    %1866 = vmatpush1.bf16.msra.mxu0 %v1426
    %1867 = vmatprep.subr.bf16.mxu0 %v1547
    %1868 = vmatpush2.bf16.msra.mxu0 %v1546
    %1869 = vmatprep.subr.bf16.mxu0 %v1539
    %1870 = vmatpush2.bf16.msra.mxu0 %v1538
    %1871 = vmatprep.subr.bf16.mxu0 %v1531
    %1872 = vmatpush2.bf16.msra.mxu0 %v1530
    %1873 = vmatprep.subr.bf16.mxu0 %v1523
    %1874 = vmatpush2.bf16.msra.mxu0 %v1522
    %1875 = vmatprep.subr.bf16.mxu0 %v1515
    %1876 = vmatpush2.bf16.msra.mxu0 %v1514
    %1877 = vmatprep.subr.bf16.mxu0 %v1507
    %1878 = vmatpush2.bf16.msra.mxu0 %v1506
    %1879 = vmatprep.subr.bf16.mxu0 %v1499
    %1880 = vmatpush2.bf16.msra.mxu0 %v1498
    %1881 = vmatprep.subr.bf16.mxu0 %v1491
    %1882 = vmatpush2.bf16.msra.mxu0 %v1490
    %1883 = vmatprep.mubr.bf16.mxu0 %v487
    %1884 = vmatmul.mubr.bf16.gmra.mxu0 %v486
    %v1885 = vpop.f32.mrf.mxu0
    %v1886 = vadd.f32 %v1845, %v1885
    %v1887 = vpop.f32.mrf.mxu0
    %v1888 = vadd.f32 %v1847, %v1887
    %v1889 = vpop.f32.mrf.mxu0
    %v1890 = vpop.f32.mrf.mxu0
    %1891 = vdwg.mxu0
    %1892 = vmatprep.subr.bf16.mxu0 %v1357
    %1893 = vmatpush1.bf16.msra.mxu0 %v1356
    %1894 = vmatprep.subr.bf16.mxu0 %v1349
    %1895 = vmatpush1.bf16.msra.mxu0 %v1348
    %1896 = vmatprep.subr.bf16.mxu0 %v1341
    %1897 = vmatpush1.bf16.msra.mxu0 %v1340
    %1898 = vmatprep.subr.bf16.mxu0 %v1333
    %1899 = vmatpush1.bf16.msra.mxu0 %v1332
    %1900 = vmatprep.subr.bf16.mxu0 %v1325
    %1901 = vmatpush1.bf16.msra.mxu0 %v1324
    %1902 = vmatprep.subr.bf16.mxu0 %v1317
    %1903 = vmatpush1.bf16.msra.mxu0 %v1316
    %1904 = vmatprep.subr.bf16.mxu0 %v1309
    %1905 = vmatpush1.bf16.msra.mxu0 %v1308
    %1906 = vmatprep.subr.bf16.mxu0 %v1301
    %1907 = vmatpush1.bf16.msra.mxu0 %v1300
    %1908 = vmatprep.subr.bf16.mxu0 %v1421
    %1909 = vmatpush2.bf16.msra.mxu0 %v1420
    %1910 = vmatprep.subr.bf16.mxu0 %v1413
    %1911 = vmatpush2.bf16.msra.mxu0 %v1412
    %1912 = vmatprep.subr.bf16.mxu0 %v1405
    %1913 = vmatpush2.bf16.msra.mxu0 %v1404
    %1914 = vmatprep.subr.bf16.mxu0 %v1397
    %1915 = vmatpush2.bf16.msra.mxu0 %v1396
    %1916 = vmatprep.subr.bf16.mxu0 %v1389
    %1917 = vmatpush2.bf16.msra.mxu0 %v1388
    %1918 = vmatprep.subr.bf16.mxu0 %v1381
    %1919 = vmatpush2.bf16.msra.mxu0 %v1380
    %1920 = vmatprep.subr.bf16.mxu0 %v1373
    %1921 = vmatpush2.bf16.msra.mxu0 %v1372
    %1922 = vmatprep.subr.bf16.mxu0 %v1365
    %1923 = vmatpush2.bf16.msra.mxu0 %v1364
    %1924 = vmatprep.mubr.bf16.mxu0 %v485
    %1925 = vmatmul.mubr.bf16.gmra.mxu0 %v484
    %v1926 = vpop.f32.mrf.mxu0
    %v1927 = vadd.f32 %v501, %v1926
    %v1928 = vpop.f32.mrf.mxu0
    %v1929 = vadd.f32 %v505, %v1928
    %v1930 = vpop.f32.mrf.mxu0
    %v1931 = vpop.f32.mrf.mxu0
    %1932 = vdwg.mxu0
    %1933 = vmatprep.subr.bf16.mxu0 %v1485
    %1934 = vmatpush1.bf16.msra.mxu0 %v1484
    %1935 = vmatprep.subr.bf16.mxu0 %v1477
    %1936 = vmatpush1.bf16.msra.mxu0 %v1476
    %1937 = vmatprep.subr.bf16.mxu0 %v1469
    %1938 = vmatpush1.bf16.msra.mxu0 %v1468
    %1939 = vmatprep.subr.bf16.mxu0 %v1461
    %1940 = vmatpush1.bf16.msra.mxu0 %v1460
    %1941 = vmatprep.subr.bf16.mxu0 %v1453
    %1942 = vmatpush1.bf16.msra.mxu0 %v1452
    %1943 = vmatprep.subr.bf16.mxu0 %v1445
    %1944 = vmatpush1.bf16.msra.mxu0 %v1444
    %1945 = vmatprep.subr.bf16.mxu0 %v1437
    %1946 = vmatpush1.bf16.msra.mxu0 %v1436
    %1947 = vmatprep.subr.bf16.mxu0 %v1429
    %1948 = vmatpush1.bf16.msra.mxu0 %v1428
    %1949 = vmatprep.subr.bf16.mxu0 %v1549
    %1950 = vmatpush2.bf16.msra.mxu0 %v1548
    %1951 = vmatprep.subr.bf16.mxu0 %v1541
    %1952 = vmatpush2.bf16.msra.mxu0 %v1540
    %1953 = vmatprep.subr.bf16.mxu0 %v1533
    %1954 = vmatpush2.bf16.msra.mxu0 %v1532
    %1955 = vmatprep.subr.bf16.mxu0 %v1525
    %1956 = vmatpush2.bf16.msra.mxu0 %v1524
    %1957 = vmatprep.subr.bf16.mxu0 %v1517
    %1958 = vmatpush2.bf16.msra.mxu0 %v1516
    %1959 = vmatprep.subr.bf16.mxu0 %v1509
    %1960 = vmatpush2.bf16.msra.mxu0 %v1508
    %1961 = vmatprep.subr.bf16.mxu0 %v1501
    %1962 = vmatpush2.bf16.msra.mxu0 %v1500
    %1963 = vmatprep.subr.bf16.mxu0 %v1493
    %1964 = vmatpush2.bf16.msra.mxu0 %v1492
    %1965 = vmatprep.mubr.bf16.mxu0 %v487
    %1966 = vmatmul.mubr.bf16.gmra.mxu0 %v486
    %v1967 = vpop.f32.mrf.mxu0
    %v1968 = vadd.f32 %v1927, %v1967
    %v1969 = vpop.f32.mrf.mxu0
    %v1970 = vadd.f32 %v1929, %v1969
    %v1971 = vpop.f32.mrf.mxu0
    %v1972 = vpop.f32.mrf.mxu0
    %1973 = vdwg.mxu0
    %1974 = vmatprep.subr.bf16.mxu0 %v1359
    %1975 = vmatpush1.bf16.msra.mxu0 %v1358
    %1976 = vmatprep.subr.bf16.mxu0 %v1351
    %1977 = vmatpush1.bf16.msra.mxu0 %v1350
    %1978 = vmatprep.subr.bf16.mxu0 %v1343
    %1979 = vmatpush1.bf16.msra.mxu0 %v1342
    %1980 = vmatprep.subr.bf16.mxu0 %v1335
    %1981 = vmatpush1.bf16.msra.mxu0 %v1334
    %1982 = vmatprep.subr.bf16.mxu0 %v1327
    %1983 = vmatpush1.bf16.msra.mxu0 %v1326
    %1984 = vmatprep.subr.bf16.mxu0 %v1319
    %1985 = vmatpush1.bf16.msra.mxu0 %v1318
    %1986 = vmatprep.subr.bf16.mxu0 %v1311
    %1987 = vmatpush1.bf16.msra.mxu0 %v1310
    %1988 = vmatprep.subr.bf16.mxu0 %v1303
    %1989 = vmatpush1.bf16.msra.mxu0 %v1302
    %1990 = vmatprep.subr.bf16.mxu0 %v1423
    %1991 = vmatpush2.bf16.msra.mxu0 %v1422
    %1992 = vmatprep.subr.bf16.mxu0 %v1415
    %1993 = vmatpush2.bf16.msra.mxu0 %v1414
    %1994 = vmatprep.subr.bf16.mxu0 %v1407
    %1995 = vmatpush2.bf16.msra.mxu0 %v1406
    %1996 = vmatprep.subr.bf16.mxu0 %v1399
    %1997 = vmatpush2.bf16.msra.mxu0 %v1398
    %1998 = vmatprep.subr.bf16.mxu0 %v1391
    %1999 = vmatpush2.bf16.msra.mxu0 %v1390
    %2000 = vmatprep.subr.bf16.mxu0 %v1383
    %2001 = vmatpush2.bf16.msra.mxu0 %v1382
    %2002 = vmatprep.subr.bf16.mxu0 %v1375
    %2003 = vmatpush2.bf16.msra.mxu0 %v1374
    %2004 = vmatprep.subr.bf16.mxu0 %v1367
    %2005 = vmatpush2.bf16.msra.mxu0 %v1366
    %2006 = vmatprep.mubr.bf16.mxu0 %v485
    %2007 = vmatmul.mubr.bf16.gmra.mxu0 %v484
    %v2008 = vpop.f32.mrf.mxu0
    %v2009 = vadd.f32 %v509, %v2008
    %v2010 = vpop.f32.mrf.mxu0
    %v2011 = vadd.f32 %v513, %v2010
    %v2012 = vpop.f32.mrf.mxu0
    %v2013 = vpop.f32.mrf.mxu0
    %2014 = vdwg.mxu0
    %2015 = vmatprep.subr.bf16.mxu0 %v1487
    %2016 = vmatpush1.bf16.msra.mxu0 %v1486
    %2017 = vmatprep.subr.bf16.mxu0 %v1479
    %2018 = vmatpush1.bf16.msra.mxu0 %v1478
    %2019 = vmatprep.subr.bf16.mxu0 %v1471
    %2020 = vmatpush1.bf16.msra.mxu0 %v1470
    %2021 = vmatprep.subr.bf16.mxu0 %v1463
    %2022 = vmatpush1.bf16.msra.mxu0 %v1462
    %2023 = vmatprep.subr.bf16.mxu0 %v1455
    %2024 = vmatpush1.bf16.msra.mxu0 %v1454
    %2025 = vmatprep.subr.bf16.mxu0 %v1447
    %2026 = vmatpush1.bf16.msra.mxu0 %v1446
    %2027 = vmatprep.subr.bf16.mxu0 %v1439
    %2028 = vmatpush1.bf16.msra.mxu0 %v1438
    %2029 = vmatprep.subr.bf16.mxu0 %v1431
    %2030 = vmatpush1.bf16.msra.mxu0 %v1430
    %2031 = vmatprep.subr.bf16.mxu0 %v1551
    %2032 = vmatpush2.bf16.msra.mxu0 %v1550
    %2033 = vmatprep.subr.bf16.mxu0 %v1543
    %2034 = vmatpush2.bf16.msra.mxu0 %v1542
    %2035 = vmatprep.subr.bf16.mxu0 %v1535
    %2036 = vmatpush2.bf16.msra.mxu0 %v1534
    %2037 = vmatprep.subr.bf16.mxu0 %v1527
    %2038 = vmatpush2.bf16.msra.mxu0 %v1526
    %2039 = vmatprep.subr.bf16.mxu0 %v1519
    %2040 = vmatpush2.bf16.msra.mxu0 %v1518
    %2041 = vmatprep.subr.bf16.mxu0 %v1511
    %2042 = vmatpush2.bf16.msra.mxu0 %v1510
    %2043 = vmatprep.subr.bf16.mxu0 %v1503
    %2044 = vmatpush2.bf16.msra.mxu0 %v1502
    %2045 = vmatprep.subr.bf16.mxu0 %v1495
    %2046 = vmatpush2.bf16.msra.mxu0 %v1494
    %2047 = vmatprep.mubr.bf16.mxu0 %v487
    %2048 = vmatmul.mubr.bf16.gmra.mxu0 %v486
    %v2049 = vpop.f32.mrf.mxu0
    %v2050 = vadd.f32 %v2009, %v2049
    %v2051 = vpop.f32.mrf.mxu0
    %v2052 = vadd.f32 %v2011, %v2051
    %v2053 = vpop.f32.mrf.mxu0
    %v2054 = vpop.f32.mrf.mxu0
    %2055 = vdwg.mxu0
    %2056 = vmatprep.subr.bf16.mxu0 %v1361
    %2057 = vmatpush1.bf16.msra.mxu0 %v1360
    %2058 = vmatprep.subr.bf16.mxu0 %v1353
    %2059 = vmatpush1.bf16.msra.mxu0 %v1352
    %2060 = vmatprep.subr.bf16.mxu0 %v1345
    %2061 = vmatpush1.bf16.msra.mxu0 %v1344
    %2062 = vmatprep.subr.bf16.mxu0 %v1337
    %2063 = vmatpush1.bf16.msra.mxu0 %v1336
    %2064 = vmatprep.subr.bf16.mxu0 %v1329
    %2065 = vmatpush1.bf16.msra.mxu0 %v1328
    %2066 = vmatprep.subr.bf16.mxu0 %v1321
    %2067 = vmatpush1.bf16.msra.mxu0 %v1320
    %2068 = vmatprep.subr.bf16.mxu0 %v1313
    %2069 = vmatpush1.bf16.msra.mxu0 %v1312
    %2070 = vmatprep.subr.bf16.mxu0 %v1305
    %2071 = vmatpush1.bf16.msra.mxu0 %v1304
    %2072 = vmatprep.subr.bf16.mxu0 %v1425
    %2073 = vmatpush2.bf16.msra.mxu0 %v1424
    %2074 = vmatprep.subr.bf16.mxu0 %v1417
    %2075 = vmatpush2.bf16.msra.mxu0 %v1416
    %2076 = vmatprep.subr.bf16.mxu0 %v1409
    %2077 = vmatpush2.bf16.msra.mxu0 %v1408
    %2078 = vmatprep.subr.bf16.mxu0 %v1401
    %2079 = vmatpush2.bf16.msra.mxu0 %v1400
    %2080 = vmatprep.subr.bf16.mxu0 %v1393
    %2081 = vmatpush2.bf16.msra.mxu0 %v1392
    %2082 = vmatprep.subr.bf16.mxu0 %v1385
    %2083 = vmatpush2.bf16.msra.mxu0 %v1384
    %2084 = vmatprep.subr.bf16.mxu0 %v1377
    %2085 = vmatpush2.bf16.msra.mxu0 %v1376
    %2086 = vmatprep.subr.bf16.mxu0 %v1369
    %2087 = vmatpush2.bf16.msra.mxu0 %v1368
    %2088 = vmatprep.mubr.bf16.mxu0 %v485
    %2089 = vmatmul.mubr.bf16.gmra.mxu0 %v484
    %v2090 = vpop.f32.mrf.mxu0
    %v2091 = vadd.f32 %v517, %v2090
    %v2092 = vpop.f32.mrf.mxu0
    %v2093 = vadd.f32 %v521, %v2092
    %v2094 = vpop.f32.mrf.mxu0
    %v2095 = vpop.f32.mrf.mxu0
    %2096 = vdwg.mxu0
    %2097 = vmatprep.subr.bf16.mxu0 %v1489
    %2098 = vmatpush1.bf16.msra.mxu0 %v1488
    %2099 = vmatprep.subr.bf16.mxu0 %v1481
    %2100 = vmatpush1.bf16.msra.mxu0 %v1480
    %2101 = vmatprep.subr.bf16.mxu0 %v1473
    %2102 = vmatpush1.bf16.msra.mxu0 %v1472
    %2103 = vmatprep.subr.bf16.mxu0 %v1465
    %2104 = vmatpush1.bf16.msra.mxu0 %v1464
    %2105 = vmatprep.subr.bf16.mxu0 %v1457
    %2106 = vmatpush1.bf16.msra.mxu0 %v1456
    %2107 = vmatprep.subr.bf16.mxu0 %v1449
    %2108 = vmatpush1.bf16.msra.mxu0 %v1448
    %2109 = vmatprep.subr.bf16.mxu0 %v1441
    %2110 = vmatpush1.bf16.msra.mxu0 %v1440
    %2111 = vmatprep.subr.bf16.mxu0 %v1433
    %2112 = vmatpush1.bf16.msra.mxu0 %v1432
    %2113 = vmatprep.subr.bf16.mxu0 %v1553
    %2114 = vmatpush2.bf16.msra.mxu0 %v1552
    %2115 = vmatprep.subr.bf16.mxu0 %v1545
    %2116 = vmatpush2.bf16.msra.mxu0 %v1544
    %2117 = vmatprep.subr.bf16.mxu0 %v1537
    %2118 = vmatpush2.bf16.msra.mxu0 %v1536
    %2119 = vmatprep.subr.bf16.mxu0 %v1529
    %2120 = vmatpush2.bf16.msra.mxu0 %v1528
    %2121 = vmatprep.subr.bf16.mxu0 %v1521
    %2122 = vmatpush2.bf16.msra.mxu0 %v1520
    %2123 = vmatprep.subr.bf16.mxu0 %v1513
    %2124 = vmatpush2.bf16.msra.mxu0 %v1512
    %2125 = vmatprep.subr.bf16.mxu0 %v1505
    %2126 = vmatpush2.bf16.msra.mxu0 %v1504
    %2127 = vmatprep.subr.bf16.mxu0 %v1497
    %2128 = vmatpush2.bf16.msra.mxu0 %v1496
    %2129 = vmatprep.mubr.bf16.mxu0 %v487
    %2130 = vmatmul.mubr.bf16.gmra.mxu0 %v486
    %v2131 = vpop.f32.mrf.mxu0
    %v2132 = vadd.f32 %v2091, %v2131
    %v2133 = vpop.f32.mrf.mxu0
    %v2134 = vadd.f32 %v2093, %v2133
    %v2135 = vpop.f32.mrf.mxu0
    %v2136 = vpop.f32.mrf.mxu0
    %2137 = vdwg.mxu0
    %v2138 = vmax.f32 %v1886, 0.0
    %v2139 = vmax.f32 %v1888, 0.0
    %v2140 = vmax.f32 %v1968, 0.0
    %v2141 = vmax.f32 %v1970, 0.0
    %v2142 = vmax.f32 %v2050, 0.0
    %v2143 = vmax.f32 %v2052, 0.0
    %v2144 = vmax.f32 %v2132, 0.0
    %v2145 = vmax.f32 %v2134, 0.0
    %v2146 = vpack.c.bf16 %v2138, %v2138
    %v2147 = vpack.c.bf16 %v2139, %v2139
    %v2148 = vpack.c.bf16 %v2140, %v2140
    %v2149 = vpack.c.bf16 %v2141, %v2141
    %v2150 = vpack.c.bf16 %v2142, %v2142
    %v2151 = vpack.c.bf16 %v2143, %v2143
    %v2152 = vpack.c.bf16 %v2144, %v2144
    %v2153 = vpack.c.bf16 %v2145, %v2145
    %v2154 = vld [vmem:[%s4] sm:$0x1]
    %v2156 = vlaneseq
    %v2157 = vshrl.u32 %v2156, 7
    %v2158 = vsub.s32 0, %v2157
    %v2159 = vrot.slane %v2154, %v2158
    %v2289 = vunpack.c.l.b16 %v348
    %v2290 = vunpack.c.l.b16 %v349
    %v2291 = vunpack.c.l.b16 %v350
    %v2292 = vunpack.c.l.b16 %v351
    %v2293 = vunpack.c.l.b16 %v352
    %v2294 = vunpack.c.l.b16 %v353
    %v2295 = vunpack.c.l.b16 %v354
    %v2296 = vunpack.c.l.b16 %v355
    %v2297 = vunpack.c.l.b16 %v356
    %v2298 = vunpack.c.l.b16 %v357
    %v2299 = vunpack.c.l.b16 %v358
    %v2300 = vunpack.c.l.b16 %v359
    %v2301 = vunpack.c.l.b16 %v360
    %v2302 = vunpack.c.l.b16 %v361
    %v2303 = vunpack.c.l.b16 %v362
    %v2304 = vunpack.c.l.b16 %v363
    %v2305 = vunpack.c.l.b16 %v364
    %v2306 = vunpack.c.l.b16 %v365
    %v2307 = vunpack.c.l.b16 %v366
    %v2308 = vunpack.c.l.b16 %v367
    %v2309 = vunpack.c.l.b16 %v368
    %v2310 = vunpack.c.l.b16 %v369
    %v2311 = vunpack.c.l.b16 %v370
    %v2312 = vunpack.c.l.b16 %v371
    %v2313 = vunpack.c.l.b16 %v372
    %v2314 = vunpack.c.l.b16 %v373
    %v2315 = vunpack.c.l.b16 %v374
    %v2316 = vunpack.c.l.b16 %v375
    %v2317 = vunpack.c.l.b16 %v376
    %v2318 = vunpack.c.l.b16 %v377
    %v2319 = vunpack.c.l.b16 %v378
    %v2320 = vunpack.c.l.b16 %v379
    %v2321 = vunpack.c.l.b16 %v380
    %v2322 = vunpack.c.l.b16 %v381
    %v2323 = vunpack.c.l.b16 %v382
    %v2324 = vunpack.c.l.b16 %v383
    %v2325 = vunpack.c.l.b16 %v384
    %v2326 = vunpack.c.l.b16 %v385
    %v2327 = vunpack.c.l.b16 %v386
    %v2328 = vunpack.c.l.b16 %v387
    %v2329 = vunpack.c.l.b16 %v388
    %v2330 = vunpack.c.l.b16 %v389
    %v2331 = vunpack.c.l.b16 %v390
    %v2332 = vunpack.c.l.b16 %v391
    %v2333 = vunpack.c.l.b16 %v392
    %v2334 = vunpack.c.l.b16 %v393
    %v2335 = vunpack.c.l.b16 %v394
    %v2336 = vunpack.c.l.b16 %v395
    %v2337 = vunpack.c.l.b16 %v396
    %v2338 = vunpack.c.l.b16 %v397
    %v2339 = vunpack.c.l.b16 %v398
    %v2340 = vunpack.c.l.b16 %v399
    %v2341 = vunpack.c.l.b16 %v400
    %v2342 = vunpack.c.l.b16 %v401
    %v2343 = vunpack.c.l.b16 %v402
    %v2344 = vunpack.c.l.b16 %v403
    %v2345 = vunpack.c.l.b16 %v404
    %v2346 = vunpack.c.l.b16 %v405
    %v2347 = vunpack.c.l.b16 %v406
    %v2348 = vunpack.c.l.b16 %v407
    %v2349 = vunpack.c.l.b16 %v408
    %v2350 = vunpack.c.l.b16 %v409
    %v2351 = vunpack.c.l.b16 %v410
    %v2352 = vunpack.c.l.b16 %v411
    %v2353 = vunpack.c.l.b16 %v412
    %v2354 = vunpack.c.l.b16 %v413
    %v2355 = vunpack.c.l.b16 %v414
    %v2356 = vunpack.c.l.b16 %v415
    %v2357 = vunpack.c.l.b16 %v416
    %v2358 = vunpack.c.l.b16 %v417
    %v2359 = vunpack.c.l.b16 %v418
    %v2360 = vunpack.c.l.b16 %v419
    %v2361 = vunpack.c.l.b16 %v420
    %v2362 = vunpack.c.l.b16 %v421
    %v2363 = vunpack.c.l.b16 %v422
    %v2364 = vunpack.c.l.b16 %v423
    %v2365 = vunpack.c.l.b16 %v424
    %v2366 = vunpack.c.l.b16 %v425
    %v2367 = vunpack.c.l.b16 %v426
    %v2368 = vunpack.c.l.b16 %v427
    %v2369 = vunpack.c.l.b16 %v428
    %v2370 = vunpack.c.l.b16 %v429
    %v2371 = vunpack.c.l.b16 %v430
    %v2372 = vunpack.c.l.b16 %v431
    %v2373 = vunpack.c.l.b16 %v432
    %v2374 = vunpack.c.l.b16 %v433
    %v2375 = vunpack.c.l.b16 %v434
    %v2376 = vunpack.c.l.b16 %v435
    %v2377 = vunpack.c.l.b16 %v436
    %v2378 = vunpack.c.l.b16 %v437
    %v2379 = vunpack.c.l.b16 %v438
    %v2380 = vunpack.c.l.b16 %v439
    %v2381 = vunpack.c.l.b16 %v440
    %v2382 = vunpack.c.l.b16 %v441
    %v2383 = vunpack.c.l.b16 %v442
    %v2384 = vunpack.c.l.b16 %v443
    %v2385 = vunpack.c.l.b16 %v444
    %v2386 = vunpack.c.l.b16 %v445
    %v2387 = vunpack.c.l.b16 %v446
    %v2388 = vunpack.c.l.b16 %v447
    %v2389 = vunpack.c.l.b16 %v448
    %v2390 = vunpack.c.l.b16 %v449
    %v2391 = vunpack.c.l.b16 %v450
    %v2392 = vunpack.c.l.b16 %v451
    %v2393 = vunpack.c.l.b16 %v452
    %v2394 = vunpack.c.l.b16 %v453
    %v2395 = vunpack.c.l.b16 %v454
    %v2396 = vunpack.c.l.b16 %v455
    %v2397 = vunpack.c.l.b16 %v456
    %v2398 = vunpack.c.l.b16 %v457
    %v2399 = vunpack.c.l.b16 %v458
    %v2400 = vunpack.c.l.b16 %v459
    %v2401 = vunpack.c.l.b16 %v460
    %v2402 = vunpack.c.l.b16 %v461
    %v2403 = vunpack.c.l.b16 %v462
    %v2404 = vunpack.c.l.b16 %v463
    %v2405 = vunpack.c.l.b16 %v464
    %v2406 = vunpack.c.l.b16 %v465
    %v2407 = vunpack.c.l.b16 %v466
    %v2408 = vunpack.c.l.b16 %v467
    %v2409 = vunpack.c.l.b16 %v468
    %v2410 = vunpack.c.l.b16 %v469
    %v2411 = vunpack.c.l.b16 %v470
    %v2412 = vunpack.c.l.b16 %v471
    %v2413 = vunpack.c.l.b16 %v472
    %v2414 = vunpack.c.l.b16 %v473
    %v2415 = vunpack.c.l.b16 %v474
    %v2416 = vunpack.c.l.b16 %v475
    %v2417 = vpack.c.b16 %v2290, %v2289
    %v2418 = vpack.c.b16 %v2292, %v2291
    %v2419 = vpack.c.b16 %v2294, %v2293
    %v2420 = vpack.c.b16 %v2296, %v2295
    %v2421 = vpack.c.b16 %v2298, %v2297
    %v2422 = vpack.c.b16 %v2300, %v2299
    %v2423 = vpack.c.b16 %v2302, %v2301
    %v2424 = vpack.c.b16 %v2304, %v2303
    %v2425 = vpack.c.b16 %v2306, %v2305
    %v2426 = vpack.c.b16 %v2308, %v2307
    %v2427 = vpack.c.b16 %v2310, %v2309
    %v2428 = vpack.c.b16 %v2312, %v2311
    %v2429 = vpack.c.b16 %v2314, %v2313
    %v2430 = vpack.c.b16 %v2316, %v2315
    %v2431 = vpack.c.b16 %v2318, %v2317
    %v2432 = vpack.c.b16 %v2320, %v2319
    %v2433 = vpack.c.b16 %v2322, %v2321
    %v2434 = vpack.c.b16 %v2324, %v2323
    %v2435 = vpack.c.b16 %v2326, %v2325
    %v2436 = vpack.c.b16 %v2328, %v2327
    %v2437 = vpack.c.b16 %v2330, %v2329
    %v2438 = vpack.c.b16 %v2332, %v2331
    %v2439 = vpack.c.b16 %v2334, %v2333
    %v2440 = vpack.c.b16 %v2336, %v2335
    %v2441 = vpack.c.b16 %v2338, %v2337
    %v2442 = vpack.c.b16 %v2340, %v2339
    %v2443 = vpack.c.b16 %v2342, %v2341
    %v2444 = vpack.c.b16 %v2344, %v2343
    %v2445 = vpack.c.b16 %v2346, %v2345
    %v2446 = vpack.c.b16 %v2348, %v2347
    %v2447 = vpack.c.b16 %v2350, %v2349
    %v2448 = vpack.c.b16 %v2352, %v2351
    %v2449 = vpack.c.b16 %v2354, %v2353
    %v2450 = vpack.c.b16 %v2356, %v2355
    %v2451 = vpack.c.b16 %v2358, %v2357
    %v2452 = vpack.c.b16 %v2360, %v2359
    %v2453 = vpack.c.b16 %v2362, %v2361
    %v2454 = vpack.c.b16 %v2364, %v2363
    %v2455 = vpack.c.b16 %v2366, %v2365
    %v2456 = vpack.c.b16 %v2368, %v2367
    %v2457 = vpack.c.b16 %v2370, %v2369
    %v2458 = vpack.c.b16 %v2372, %v2371
    %v2459 = vpack.c.b16 %v2374, %v2373
    %v2460 = vpack.c.b16 %v2376, %v2375
    %v2461 = vpack.c.b16 %v2378, %v2377
    %v2462 = vpack.c.b16 %v2380, %v2379
    %v2463 = vpack.c.b16 %v2382, %v2381
    %v2464 = vpack.c.b16 %v2384, %v2383
    %v2465 = vpack.c.b16 %v2386, %v2385
    %v2466 = vpack.c.b16 %v2388, %v2387
    %v2467 = vpack.c.b16 %v2390, %v2389
    %v2468 = vpack.c.b16 %v2392, %v2391
    %v2469 = vpack.c.b16 %v2394, %v2393
    %v2470 = vpack.c.b16 %v2396, %v2395
    %v2471 = vpack.c.b16 %v2398, %v2397
    %v2472 = vpack.c.b16 %v2400, %v2399
    %v2473 = vpack.c.b16 %v2402, %v2401
    %v2474 = vpack.c.b16 %v2404, %v2403
    %v2475 = vpack.c.b16 %v2406, %v2405
    %v2476 = vpack.c.b16 %v2408, %v2407
    %v2477 = vpack.c.b16 %v2410, %v2409
    %v2478 = vpack.c.b16 %v2412, %v2411
    %v2479 = vpack.c.b16 %v2414, %v2413
    %v2480 = vpack.c.b16 %v2416, %v2415
    %2545 = vmatprep.subr.bf16.mxu0 0
    %2546 = vmatpush1.bf16.msra.mxu0 %v2424
    %2547 = vmatprep.subr.bf16.mxu0 0
    %2548 = vmatpush1.bf16.msra.mxu0 %v2423
    %2549 = vmatprep.subr.bf16.mxu0 0
    %2550 = vmatpush1.bf16.msra.mxu0 %v2422
    %2551 = vmatprep.subr.bf16.mxu0 0
    %2552 = vmatpush1.bf16.msra.mxu0 %v2421
    %2553 = vmatprep.subr.bf16.mxu0 0
    %2554 = vmatpush1.bf16.msra.mxu0 %v2420
    %2555 = vmatprep.subr.bf16.mxu0 0
    %2556 = vmatpush1.bf16.msra.mxu0 %v2419
    %2557 = vmatprep.subr.bf16.mxu0 0
    %2558 = vmatpush1.bf16.msra.mxu0 %v2418
    %2559 = vmatprep.subr.bf16.mxu0 0
    %2560 = vmatpush1.bf16.msra.mxu0 %v2417
    %2561 = vmatprep.subr.bf16.mxu0 0
    %2562 = vmatpush2.bf16.msra.mxu0 %v2432
    %2563 = vmatprep.subr.bf16.mxu0 0
    %2564 = vmatpush2.bf16.msra.mxu0 %v2431
    %2565 = vmatprep.subr.bf16.mxu0 0
    %2566 = vmatpush2.bf16.msra.mxu0 %v2430
    %2567 = vmatprep.subr.bf16.mxu0 0
    %2568 = vmatpush2.bf16.msra.mxu0 %v2429
    %2569 = vmatprep.subr.bf16.mxu0 0
    %2570 = vmatpush2.bf16.msra.mxu0 %v2428
    %2571 = vmatprep.subr.bf16.mxu0 0
    %2572 = vmatpush2.bf16.msra.mxu0 %v2427
    %2573 = vmatprep.subr.bf16.mxu0 0
    %2574 = vmatpush2.bf16.msra.mxu0 %v2426
    %2575 = vmatprep.subr.bf16.mxu0 0
    %2576 = vmatpush2.bf16.msra.mxu0 %v2425
    %2577 = vmatprep.mubr.bf16.mxu0 %v2147
    %2578 = vmatmul.mubr.bf16.gmra.mxu0 %v2146
    %v2579 = vpop.f32.mrf.mxu0
    %v2580 = vadd.f32 %v2159, %v2579
    %v2581 = vpop.f32.mrf.mxu0
    %v2582 = vpop.f32.mrf.mxu0
    %v2583 = vpop.f32.mrf.mxu0
    %2584 = vdwg.mxu0
    %2585 = vmatprep.subr.bf16.mxu0 0
    %2586 = vmatpush1.bf16.msra.mxu0 %v2440
    %2587 = vmatprep.subr.bf16.mxu0 0
    %2588 = vmatpush1.bf16.msra.mxu0 %v2439
    %2589 = vmatprep.subr.bf16.mxu0 0
    %2590 = vmatpush1.bf16.msra.mxu0 %v2438
    %2591 = vmatprep.subr.bf16.mxu0 0
    %2592 = vmatpush1.bf16.msra.mxu0 %v2437
    %2593 = vmatprep.subr.bf16.mxu0 0
    %2594 = vmatpush1.bf16.msra.mxu0 %v2436
    %2595 = vmatprep.subr.bf16.mxu0 0
    %2596 = vmatpush1.bf16.msra.mxu0 %v2435
    %2597 = vmatprep.subr.bf16.mxu0 0
    %2598 = vmatpush1.bf16.msra.mxu0 %v2434
    %2599 = vmatprep.subr.bf16.mxu0 0
    %2600 = vmatpush1.bf16.msra.mxu0 %v2433
    %2601 = vmatprep.subr.bf16.mxu0 0
    %2602 = vmatpush2.bf16.msra.mxu0 %v2448
    %2603 = vmatprep.subr.bf16.mxu0 0
    %2604 = vmatpush2.bf16.msra.mxu0 %v2447
    %2605 = vmatprep.subr.bf16.mxu0 0
    %2606 = vmatpush2.bf16.msra.mxu0 %v2446
    %2607 = vmatprep.subr.bf16.mxu0 0
    %2608 = vmatpush2.bf16.msra.mxu0 %v2445
    %2609 = vmatprep.subr.bf16.mxu0 0
    %2610 = vmatpush2.bf16.msra.mxu0 %v2444
    %2611 = vmatprep.subr.bf16.mxu0 0
    %2612 = vmatpush2.bf16.msra.mxu0 %v2443
    %2613 = vmatprep.subr.bf16.mxu0 0
    %2614 = vmatpush2.bf16.msra.mxu0 %v2442
    %2615 = vmatprep.subr.bf16.mxu0 0
    %2616 = vmatpush2.bf16.msra.mxu0 %v2441
    %2617 = vmatprep.mubr.bf16.mxu0 %v2149
    %2618 = vmatmul.mubr.bf16.gmra.mxu0 %v2148
    %v2619 = vpop.f32.mrf.mxu0
    %v2620 = vadd.f32 %v2580, %v2619
    %v2621 = vpop.f32.mrf.mxu0
    %v2622 = vpop.f32.mrf.mxu0
    %v2623 = vpop.f32.mrf.mxu0
    %2624 = vdwg.mxu0
    %2625 = vmatprep.subr.bf16.mxu0 0
    %2626 = vmatpush1.bf16.msra.mxu0 %v2456
    %2627 = vmatprep.subr.bf16.mxu0 0
    %2628 = vmatpush1.bf16.msra.mxu0 %v2455
    %2629 = vmatprep.subr.bf16.mxu0 0
    %2630 = vmatpush1.bf16.msra.mxu0 %v2454
    %2631 = vmatprep.subr.bf16.mxu0 0
    %2632 = vmatpush1.bf16.msra.mxu0 %v2453
    %2633 = vmatprep.subr.bf16.mxu0 0
    %2634 = vmatpush1.bf16.msra.mxu0 %v2452
    %2635 = vmatprep.subr.bf16.mxu0 0
    %2636 = vmatpush1.bf16.msra.mxu0 %v2451
    %2637 = vmatprep.subr.bf16.mxu0 0
    %2638 = vmatpush1.bf16.msra.mxu0 %v2450
    %2639 = vmatprep.subr.bf16.mxu0 0
    %2640 = vmatpush1.bf16.msra.mxu0 %v2449
    %2641 = vmatprep.subr.bf16.mxu0 0
    %2642 = vmatpush2.bf16.msra.mxu0 %v2464
    %2643 = vmatprep.subr.bf16.mxu0 0
    %2644 = vmatpush2.bf16.msra.mxu0 %v2463
    %2645 = vmatprep.subr.bf16.mxu0 0
    %2646 = vmatpush2.bf16.msra.mxu0 %v2462
    %2647 = vmatprep.subr.bf16.mxu0 0
    %2648 = vmatpush2.bf16.msra.mxu0 %v2461
    %2649 = vmatprep.subr.bf16.mxu0 0
    %2650 = vmatpush2.bf16.msra.mxu0 %v2460
    %2651 = vmatprep.subr.bf16.mxu0 0
    %2652 = vmatpush2.bf16.msra.mxu0 %v2459
    %2653 = vmatprep.subr.bf16.mxu0 0
    %2654 = vmatpush2.bf16.msra.mxu0 %v2458
    %2655 = vmatprep.subr.bf16.mxu0 0
    %2656 = vmatpush2.bf16.msra.mxu0 %v2457
    %2657 = vmatprep.mubr.bf16.mxu0 %v2151
    %2658 = vmatmul.mubr.bf16.gmra.mxu0 %v2150
    %v2659 = vpop.f32.mrf.mxu0
    %v2660 = vadd.f32 %v2620, %v2659
    %v2661 = vpop.f32.mrf.mxu0
    %v2662 = vpop.f32.mrf.mxu0
    %v2663 = vpop.f32.mrf.mxu0
    %2664 = vdwg.mxu0
    %2665 = vmatprep.subr.bf16.mxu0 0
    %2666 = vmatpush1.bf16.msra.mxu0 %v2472
    %2667 = vmatprep.subr.bf16.mxu0 0
    %2668 = vmatpush1.bf16.msra.mxu0 %v2471
    %2669 = vmatprep.subr.bf16.mxu0 0
    %2670 = vmatpush1.bf16.msra.mxu0 %v2470
    %2671 = vmatprep.subr.bf16.mxu0 0
    %2672 = vmatpush1.bf16.msra.mxu0 %v2469
    %2673 = vmatprep.subr.bf16.mxu0 0
    %2674 = vmatpush1.bf16.msra.mxu0 %v2468
    %2675 = vmatprep.subr.bf16.mxu0 0
    %2676 = vmatpush1.bf16.msra.mxu0 %v2467
    %2677 = vmatprep.subr.bf16.mxu0 0
    %2678 = vmatpush1.bf16.msra.mxu0 %v2466
    %2679 = vmatprep.subr.bf16.mxu0 0
    %2680 = vmatpush1.bf16.msra.mxu0 %v2465
    %2681 = vmatprep.subr.bf16.mxu0 0
    %2682 = vmatpush2.bf16.msra.mxu0 %v2480
    %2683 = vmatprep.subr.bf16.mxu0 0
    %2684 = vmatpush2.bf16.msra.mxu0 %v2479
    %2685 = vmatprep.subr.bf16.mxu0 0
    %2686 = vmatpush2.bf16.msra.mxu0 %v2478
    %2687 = vmatprep.subr.bf16.mxu0 0
    %2688 = vmatpush2.bf16.msra.mxu0 %v2477
    %2689 = vmatprep.subr.bf16.mxu0 0
    %2690 = vmatpush2.bf16.msra.mxu0 %v2476
    %2691 = vmatprep.subr.bf16.mxu0 0
    %2692 = vmatpush2.bf16.msra.mxu0 %v2475
    %2693 = vmatprep.subr.bf16.mxu0 0
    %2694 = vmatpush2.bf16.msra.mxu0 %v2474
    %2695 = vmatprep.subr.bf16.mxu0 0
    %2696 = vmatpush2.bf16.msra.mxu0 %v2473
    %2697 = vmatprep.mubr.bf16.mxu0 %v2153
    %2698 = vmatmul.mubr.bf16.gmra.mxu0 %v2152
    %v2699 = vpop.f32.mrf.mxu0
    %v2700 = vadd.f32 %v2660, %v2699
    %v2701 = vpop.f32.mrf.mxu0
    %v2702 = vpop.f32.mrf.mxu0
    %v2703 = vpop.f32.mrf.mxu0
    %2704 = vdwg.mxu0
    %v2705 = vld [vmem:[%s5] sm:$0xf]
    %v2706 = vcvt.s32.f32 %v2705
    %v2707 = vld [vmem:[#allocation10] sm:$0xff]
    %v2708 = vld [vmem:[#allocation10 + $0x8] sm:$0xff]
    %vm2709 = vcmask 130048
    %v2711 = vsel %vm2709, %v2706, 0
    %2713 = vmatprep.subr.mxu0 0.0
    %2714 = vmatpush1.msra.mxu0 0.0
    %2715 = vmatprep.subr.mxu0 0.0
    %2716 = vmatpush1.msra.mxu0 0.0
    %2717 = vmatprep.subr.mxu0 0.0
    %2718 = vmatpush1.msra.mxu0 0.0
    %2719 = vmatprep.subr.mxu0 0.0
    %2720 = vmatpush1.msra.mxu0 0.0
    %2721 = vmatprep.subr.mxu0 0.0
    %2722 = vmatpush1.msra.mxu0 0.0
    %2723 = vmatprep.subr.mxu0 0.0
    %2724 = vmatpush1.msra.mxu0 0.0
    %2725 = vmatprep.subr.mxu0 0.0
    %2726 = vmatpush1.msra.mxu0 0.0
    %2727 = vmatprep.subr.mxu0 0.0
    %2728 = vmatpush1.msra.mxu0 0.0
    %2729 = vmatprep.subr.mxu0 0.0
    %2730 = vmatpush1.msra.mxu0 0.0
    %2731 = vmatprep.subr.mxu0 0.0
    %2732 = vmatpush1.msra.mxu0 0.0
    %2733 = vmatprep.subr.mxu0 0.0
    %2734 = vmatpush1.msra.mxu0 0.0
    %2735 = vmatprep.subr.mxu0 0.0
    %2736 = vmatpush1.msra.mxu0 0.0
    %2737 = vmatprep.subr.mxu0 0.0
    %2738 = vmatpush1.msra.mxu0 0.0
    %2739 = vmatprep.subr.mxu0 0.0
    %2740 = vmatpush1.msra.mxu0 0.0
    %2741 = vmatprep.subr.mxu0 0.0
    %2742 = vmatpush1.msra.mxu0 %v2708
    %2743 = vmatprep.subr.mxu0 0.0
    %2744 = vmatpush1.msra.mxu0 %v2707
    %2745 = vmatprep.subr.mxu0 0.0
    %2746 = vmatpush2.msra.mxu0 0.0
    %2747 = vmatprep.subr.mxu0 0.0
    %2748 = vmatpush2.msra.mxu0 0.0
    %2749 = vmatprep.subr.mxu0 0.0
    %2750 = vmatpush2.msra.mxu0 0.0
    %2751 = vmatprep.subr.mxu0 0.0
    %2752 = vmatpush2.msra.mxu0 0.0
    %2753 = vmatprep.subr.mxu0 0.0
    %2754 = vmatpush2.msra.mxu0 0.0
    %2755 = vmatprep.subr.mxu0 0.0
    %2756 = vmatpush2.msra.mxu0 0.0
    %2757 = vmatprep.subr.mxu0 0.0
    %2758 = vmatpush2.msra.mxu0 0.0
    %2759 = vmatprep.subr.mxu0 0.0
    %2760 = vmatpush2.msra.mxu0 0.0
    %2761 = vmatprep.subr.mxu0 0.0
    %2762 = vmatpush2.msra.mxu0 0.0
    %2763 = vmatprep.subr.mxu0 0.0
    %2764 = vmatpush2.msra.mxu0 0.0
    %2765 = vmatprep.subr.mxu0 0.0
    %2766 = vmatpush2.msra.mxu0 0.0
    %2767 = vmatprep.subr.mxu0 0.0
    %2768 = vmatpush2.msra.mxu0 0.0
    %2769 = vmatprep.subr.mxu0 0.0
    %2770 = vmatpush2.msra.mxu0 0.0
    %2771 = vmatprep.subr.mxu0 0.0
    %2772 = vmatpush2.msra.mxu0 0.0
    %2773 = vmatprep.subr.mxu0 0.0
    %2774 = vmatpush2.msra.mxu0 0.0
    %2775 = vmatprep.subr.mxu0 0.0
    %2776 = vmatpush2.msra.mxu0 0.0
    %2777 = vmatprep.mubr.f32.mxu0 0.0
    %2778 = vmatmul.mubr.f32.gmra.mxu0 %v2711
    %v2779 = vpop.f32.mrf.mxu0
    %v2780 = vadd.f32 0.0, %v2779
    %v2781 = vpop.f32.mrf.mxu0
    %2782 = vdwg.mxu0
    %v2783 = vmul.f32 %v2700, %v2780
    %2784 = vst [vmem:[#allocation11] sm:$0xf] %v2783
    // Predicated region
    $region50: #{tpu_custom_call.1} parent=1 // pred_check
      _
    $region51: #{tpu_custom_call.1} parent=1 // pred_check_branch
      %2786 = sbr.rel (0) target = $region53
    $region52: #{tpu_custom_call.1} parent=1 // pred_region
      %s2788 = ssub.s32 64, 64
      %2789 = vsyncadd [#allocation4], %s2788
      %s2791 = sshll.u32 [#allocation11], 4
      %s2792 = int_to_ptr.vmem [resolvable:$true] %s2791
      %2794 = dma.vmem_to_hbm [thread:$0]  %s2792, 64, %s7, [#allocation4]
    $region53: #{tpu_custom_call.1} parent=1 // pred_fallthru
      _
    // Predicated region
    $region54: #{tpu_custom_call.1} parent=1 // pred_check
      _
    $region55: #{tpu_custom_call.1} parent=1 // pred_check_branch
      %2796 = sbr.rel (0) target = $region57
    $region56: #{tpu_custom_call.1} parent=1 // pred_region
      %2797 = dma.done [#allocation4], 64
    $region57: #{tpu_custom_call.1} parent=1 // pred_fallthru
      _
    %2798 = vsyncpa [#allocation3], 1
    %2799 = vsyncpa [#allocation6], 1
    %2800 = vsyncpa [#allocation9], 1
    %2801 = vsyncpa [#allocation4], 1

</llo_original>
